<compile_context>
chip_gen: v7x
topology: tpu7x:2x2x1
jax: 0.10.0
libtpu: 0.0.40
codegen_flags: <defaults>
</compile_context>

<pallas_src>
import jax
import jax.numpy as jnp
from jax.experimental import pallas as pl
from jax.experimental.pallas import tpu as pltpu


_VMEM = pl.BlockSpec(memory_space=pltpu.MemorySpace.VMEM)


# ------------------------------ fused kernel --------------------------------

def make_gru_stack_kernel(T, B, hidden_sizes, output_size):
    """Builds a kernel closed over static sizes.

    Ref layout (positional):
      inputs : x2d (T*B, I),
               per layer l: wi (I_l, 3H_l), wh (H_l, 3H_l), bi (1, 3H_l),
                            bhn (1, H_l), h0 (B, H_l),
               w_fc (H_last, O), b_fc (1, O)
      outputs: out (B, O), hT_l (B, H_l) for each layer
      scratch: seq_l (T*B, H_l) VMEM for layers 0..L-2 (feed the next layer)
    """
    L = len(hidden_sizes)
    n_in = 1 + 5 * L + 2
    n_out = 1 + L

    def kernel(*refs):
        in_refs = refs[:n_in]
        out_ref = refs[n_in]
        hT_refs = refs[n_in + 1:n_in + n_out]
        seq_scrs = refs[n_in + n_out:]

        x_ref = in_refs[0]
        wfc_ref, bfc_ref = in_refs[n_in - 2], in_refs[n_in - 1]

        seq = x_ref[...]                      # (T*B, I_0) time-major, flattened
        h = None
        for l in range(L):
            wi_ref, wh_ref, bi_ref, bhn_ref, h0_ref = in_refs[1 + 5 * l:1 + 5 * (l + 1)]
            H = hidden_sizes[l]

            # --- hoisted input projection: one matmul for the whole sequence ---
            if wi_ref.shape[0] == 1:
                # K=1 contraction == scalar broadcast-multiply -> keep it off the MXU
                gi = seq * wi_ref[...] + bi_ref[...]                        # (T*B, 3H)
            else:
                gi = jnp.dot(seq, wi_ref[...],
                             preferred_element_type=jnp.float32) + bi_ref[...]
            # r/z slices of `gi` already include the hidden biases (folded in wrapper).

            wh = wh_ref[...]                                   # (H, 3H)  hoisted load
            bhn = jnp.broadcast_to(bhn_ref[...], (B, H))       # hoisted broadcast
            h = h0_ref[...]                                    # (B, H)

            # --- fully-unrolled recurrence: one (B,H)x(H,3H) matmul per step ---
            for t in range(T):
                gi_t = gi[t * B:(t + 1) * B, :]                             # (B, 3H)
                gh = jnp.dot(h, wh, preferred_element_type=jnp.float32)     # (B, 3H)
                r = jax.nn.sigmoid(gi_t[:, :H] + gh[:, :H])
                z = jax.nn.sigmoid(gi_t[:, H:2 * H] + gh[:, H:2 * H])
                n = jnp.tanh(gi_t[:, 2 * H:] + r * (gh[:, 2 * H:] + bhn))
                h = (1.0 - z) * n + z * h
                if l < L - 1:
                    seq_scrs[l][t * B:(t + 1) * B, :] = h      # VMEM only, no HBM
            hT_refs[l][...] = h
            if l < L - 1:
                seq = seq_scrs[l][...]                         # feeds next layer

        # --- fused FC + tanh head on the last timestep's hidden state ---
        out_ref[...] = jnp.tanh(
            jnp.dot(h, wfc_ref[...], preferred_element_type=jnp.float32) + bfc_ref[...])

    return kernel


# ------------------------------ model forward -------------------------------

def gru_model_forward(params, x, h_list):
    """x: (B, T, input_size) batch_first; h_list[i]: (1, B, H_i).
    Returns (out (B, output_size), [h_i (1, B, H_i)]) — same semantics as PyTorch."""
    B, T, I = x.shape
    hidden_sizes = [w_hh.shape[1] for (_, w_hh, _, _) in params["gru"]]
    w_fc, b_fc = params["fc"]
    O = w_fc.shape[0]

    # time-major, flattened: row t*B + b holds timestep t of batch element b
    x2d = jnp.transpose(x, (1, 0, 2)).reshape(T * B, I)

    inputs = [x2d]
    for (w_ih, w_hh, b_ih, b_hh), h0 in zip(params["gru"], h_list):
        H = w_hh.shape[1]
        # PyTorch packs gates as rows [r; z; n]; transpose so the kernel does x @ W.
        wi = jnp.transpose(w_ih)                     # (I_l, 3H)
        wh = jnp.transpose(w_hh)                     # (H,   3H)
        bir, biz, bin_ = jnp.split(b_ih, 3)
        bhr, bhz, bhn = jnp.split(b_hh, 3)
        # Fold hidden r/z biases into the hoisted input bias; b_hn stays separate
        # because it sits inside r * (gh_n + b_hn).
        bi = jnp.concatenate([bir + bhr, biz + bhz, bin_]).reshape(1, 3 * H)
        inputs += [wi, wh, bi, bhn.reshape(1, H), h0[0]]
    inputs += [jnp.transpose(w_fc), b_fc.reshape(1, O)]

    kernel = make_gru_stack_kernel(T, B, hidden_sizes, O)
    out_shapes = (jax.ShapeDtypeStruct((B, O), jnp.float32),) + tuple(
        jax.ShapeDtypeStruct((B, H), jnp.float32) for H in hidden_sizes)
    scratch = [pltpu.VMEM((T * B, H), jnp.float32) for H in hidden_sizes[:-1]]

    res = pl.pallas_call(
        kernel,
        out_shape=out_shapes,
        in_specs=[_VMEM] * len(inputs),
        out_specs=tuple([_VMEM] * len(out_shapes)),
        scratch_shapes=scratch,
    )(*inputs)
    out = res[0]
    h_out = [hT[None] for hT in res[1:]]             # (1, B, H_i), mirrors PyTorch
    return out, h_out


# ----------------------------- parameter setup ------------------------------

def init_params(key, input_size, hidden_sizes, output_size):
    """PyTorch-shaped params: GRU weight_ih (3H,I), weight_hh (3H,H), biases (3H,);
    Linear weight (O, H_last), bias (O,)."""
    params = {"gru": [], "fc": None}
    in_sz = input_size
    for H in hidden_sizes:
        key, k1, k2, k3, k4 = jax.random.split(key, 5)
        bound = 1.0 / float(jnp.sqrt(H))
        w_ih = jax.random.uniform(k1, (3 * H, in_sz), jnp.float32, -bound, bound)
        w_hh = jax.random.uniform(k2, (3 * H, H), jnp.float32, -bound, bound)
        b_ih = jax.random.uniform(k3, (3 * H,), jnp.float32, -bound, bound)
        b_hh = jax.random.uniform(k4, (3 * H,), jnp.float32, -bound, bound)
        params["gru"].append((w_ih, w_hh, b_ih, b_hh))
        in_sz = H
    key, k1, k2 = jax.random.split(key, 3)
    bound = 1.0 / float(jnp.sqrt(hidden_sizes[-1]))
    w_fc = jax.random.uniform(k1, (output_size, hidden_sizes[-1]), jnp.float32, -bound, bound)
    b_fc = jax.random.uniform(k2, (output_size,), jnp.float32, -bound, bound)
    params["fc"] = (w_fc, b_fc)
    return params


# ----------------------------- pure-JAX reference ---------------------------

def gru_model_ref(params, x, h_list):
    out = x
    h_out = []
    for (w_ih, w_hh, b_ih, b_hh), h0 in zip(params["gru"], h_list):
        H = w_hh.shape[1]
        h = h0[0]
        ys = []
        for t in range(out.shape[1]):
            x_t = out[:, t, :]
            gi = x_t @ w_ih.T + b_ih
            gh = h @ w_hh.T + b_hh
            r = jax.nn.sigmoid(gi[:, :H] + gh[:, :H])
            z = jax.nn.sigmoid(gi[:, H:2 * H] + gh[:, H:2 * H])
            n = jnp.tanh(gi[:, 2 * H:] + r * gh[:, 2 * H:])
            h = (1.0 - z) * n + z * h
            ys.append(h)
        out = jnp.stack(ys, axis=1)
        h_out.append(h[None])
    last = out[:, -1, :]
    w_fc, b_fc = params["fc"]
    return jnp.tanh(last @ w_fc.T + b_fc), h_out


# ---------------------------------- main ------------------------------------

if __name__ == "__main__":
    B, T = 2, 8
    input_size = 1
    hidden_sizes = [32, 16]
    output_size = 16

    key = jax.random.PRNGKey(0)
    kp, kx = jax.random.split(key)
    params = init_params(kp, input_size, hidden_sizes, output_size)

    x = jax.random.normal(kx, (B, T, input_size), jnp.float32)
    h = [jnp.zeros((1, B, hs), jnp.float32) for hs in hidden_sizes]

    out, h_out = gru_model_forward(params, x, h)
    out = jax.block_until_ready(out)
    h_out = [jax.block_until_ready(hh) for hh in h_out]

    # correctness check against pure-JAX reference
    out_ref, h_out_ref = gru_model_ref(params, x, h)
    assert out.shape == (B, output_size)
    assert jnp.allclose(out, out_ref, rtol=1e-4, atol=1e-4)
    for a, b in zip(h_out, h_out_ref):
        assert a.shape == b.shape
        assert jnp.allclose(a, b, rtol=1e-4, atol=1e-4)

    print("KERNEL_OK")
</pallas_src>

<mosaic_0001>
module attributes {stable_mosaic.version = 11 : i64} {
  func.func @kernel(%arg0: memref<16x1xf32, #tpu.memory_space<vmem>>, %arg1: memref<1x96xf32, #tpu.memory_space<vmem>>, %arg2: memref<32x96xf32, #tpu.memory_space<vmem>>, %arg3: memref<1x96xf32, #tpu.memory_space<vmem>>, %arg4: memref<1x32xf32, #tpu.memory_space<vmem>>, %arg5: memref<2x32xf32, #tpu.memory_space<vmem>>, %arg6: memref<32x48xf32, #tpu.memory_space<vmem>>, %arg7: memref<16x48xf32, #tpu.memory_space<vmem>>, %arg8: memref<1x48xf32, #tpu.memory_space<vmem>>, %arg9: memref<1x16xf32, #tpu.memory_space<vmem>>, %arg10: memref<2x16xf32, #tpu.memory_space<vmem>>, %arg11: memref<16x16xf32, #tpu.memory_space<vmem>>, %arg12: memref<1x16xf32, #tpu.memory_space<vmem>>, %arg13: memref<2x16xf32, #tpu.memory_space<vmem>>, %arg14: memref<2x32xf32, #tpu.memory_space<vmem>>, %arg15: memref<2x16xf32, #tpu.memory_space<vmem>>, %arg16: memref<16x32xf32, #tpu.memory_space<vmem>>) attributes {dimension_semantics = [], scalar_prefetch = 0 : i64, scratch_operands = 1 : i64, tpu.core_type = #tpu.core_type<tc>} {
    %c0 = arith.constant 0 : index
    %c0_0 = arith.constant 0 : index
    %0 = vector.load %arg0[%c0, %c0_0] : memref<16x1xf32, #tpu.memory_space<vmem>>, vector<16x1xf32>
    %c0_1 = arith.constant 0 : index
    %c0_2 = arith.constant 0 : index
    %1 = vector.load %arg1[%c0_1, %c0_2] : memref<1x96xf32, #tpu.memory_space<vmem>>, vector<1x96xf32>
    %2 = vector.broadcast %0 : vector<16x1xf32> to vector<16x96xf32>
    %3 = vector.broadcast %1 : vector<1x96xf32> to vector<16x96xf32>
    %4 = arith.mulf %2, %3 : vector<16x96xf32>
    %c0_3 = arith.constant 0 : index
    %c0_4 = arith.constant 0 : index
    %5 = vector.load %arg3[%c0_3, %c0_4] : memref<1x96xf32, #tpu.memory_space<vmem>>, vector<1x96xf32>
    %6 = vector.broadcast %5 : vector<1x96xf32> to vector<16x96xf32>
    %7 = arith.addf %4, %6 : vector<16x96xf32>
    %c0_5 = arith.constant 0 : index
    %c0_6 = arith.constant 0 : index
    %8 = vector.load %arg2[%c0_5, %c0_6] : memref<32x96xf32, #tpu.memory_space<vmem>>, vector<32x96xf32>
    %c0_7 = arith.constant 0 : index
    %c0_8 = arith.constant 0 : index
    %9 = vector.load %arg4[%c0_7, %c0_8] : memref<1x32xf32, #tpu.memory_space<vmem>>, vector<1x32xf32>
    %10 = vector.shape_cast %9 : vector<1x32xf32> to vector<1x32xf32>
    %11 = vector.broadcast %10 : vector<1x32xf32> to vector<2x32xf32>
    %c0_9 = arith.constant 0 : index
    %c0_10 = arith.constant 0 : index
    %12 = vector.load %arg5[%c0_9, %c0_10] : memref<2x32xf32, #tpu.memory_space<vmem>>, vector<2x32xf32>
    %13 = vector.extract_strided_slice %7 {offsets = [0, 0], sizes = [2, 96], strides = [1, 1]} : vector<16x96xf32> to vector<2x96xf32>
    %cst = arith.constant dense<0.000000e+00> : vector<2x96xf32>
    %14 = tpu.matmul %12, %8, %cst {dimension_numbers = #tpu.dot_dimension_numbers<[1], [0], [0], [1], [0, 0, 1, 1], [], []>} : vector<2x32xf32>, vector<32x96xf32>, vector<2x96xf32> -> vector<2x96xf32>
    %15 = vector.extract_strided_slice %13 {offsets = [0, 0], sizes = [2, 32], strides = [1, 1]} : vector<2x96xf32> to vector<2x32xf32>
    %16 = vector.extract_strided_slice %14 {offsets = [0, 0], sizes = [2, 32], strides = [1, 1]} : vector<2x96xf32> to vector<2x32xf32>
    %17 = arith.addf %15, %16 : vector<2x32xf32>
    %18 = arith.negf %17 : vector<2x32xf32>
    %19 = math.exp %18 : vector<2x32xf32>
    %cst_11 = arith.constant 1.000000e+00 : f32
    %20 = vector.broadcast %cst_11 : f32 to vector<2x32xf32>
    %21 = arith.addf %20, %19 : vector<2x32xf32>
    %22 = arith.divf %20, %21 : vector<2x32xf32>
    %23 = vector.extract_strided_slice %13 {offsets = [0, 32], sizes = [2, 32], strides = [1, 1]} : vector<2x96xf32> to vector<2x32xf32>
    %24 = vector.extract_strided_slice %14 {offsets = [0, 32], sizes = [2, 32], strides = [1, 1]} : vector<2x96xf32> to vector<2x32xf32>
    %25 = arith.addf %23, %24 : vector<2x32xf32>
    %26 = arith.negf %25 : vector<2x32xf32>
    %27 = math.exp %26 : vector<2x32xf32>
    %cst_12 = arith.constant 1.000000e+00 : f32
    %28 = vector.broadcast %cst_12 : f32 to vector<2x32xf32>
    %29 = arith.addf %28, %27 : vector<2x32xf32>
    %30 = arith.divf %28, %29 : vector<2x32xf32>
    %31 = vector.extract_strided_slice %13 {offsets = [0, 64], sizes = [2, 32], strides = [1, 1]} : vector<2x96xf32> to vector<2x32xf32>
    %32 = vector.extract_strided_slice %14 {offsets = [0, 64], sizes = [2, 32], strides = [1, 1]} : vector<2x96xf32> to vector<2x32xf32>
    %33 = arith.addf %32, %11 : vector<2x32xf32>
    %34 = arith.mulf %22, %33 : vector<2x32xf32>
    %35 = arith.addf %31, %34 : vector<2x32xf32>
    %36 = math.tanh %35 : vector<2x32xf32>
    %cst_13 = arith.constant 1.000000e+00 : f32
    %37 = vector.broadcast %cst_13 : f32 to vector<2x32xf32>
    %38 = arith.subf %37, %30 : vector<2x32xf32>
    %39 = arith.mulf %38, %36 : vector<2x32xf32>
    %40 = arith.mulf %30, %12 : vector<2x32xf32>
    %41 = arith.addf %39, %40 : vector<2x32xf32>
    %c0_14 = arith.constant 0 : index
    %c0_15 = arith.constant 0 : index
    %42 = vector.load %arg16[%c0_14, %c0_15] : memref<16x32xf32, #tpu.memory_space<vmem>>, vector<2x32xf32>
    tpu.vector_store %arg16[%c0_14, %c0_15], %41 {strides = array<i32>} : memref<16x32xf32, #tpu.memory_space<vmem>>, vector<2x32xf32>,
    %43 = vector.extract_strided_slice %7 {offsets = [2, 0], sizes = [2, 96], strides = [1, 1]} : vector<16x96xf32> to vector<2x96xf32>
    %cst_16 = arith.constant dense<0.000000e+00> : vector<2x96xf32>
    %44 = tpu.matmul %41, %8, %cst_16 {dimension_numbers = #tpu.dot_dimension_numbers<[1], [0], [0], [1], [0, 0, 1, 1], [], []>} : vector<2x32xf32>, vector<32x96xf32>, vector<2x96xf32> -> vector<2x96xf32>
    %45 = vector.extract_strided_slice %43 {offsets = [0, 0], sizes = [2, 32], strides = [1, 1]} : vector<2x96xf32> to vector<2x32xf32>
    %46 = vector.extract_strided_slice %44 {offsets = [0, 0], sizes = [2, 32], strides = [1, 1]} : vector<2x96xf32> to vector<2x32xf32>
    %47 = arith.addf %45, %46 : vector<2x32xf32>
    %48 = arith.negf %47 : vector<2x32xf32>
    %49 = math.exp %48 : vector<2x32xf32>
    %cst_17 = arith.constant 1.000000e+00 : f32
    %50 = vector.broadcast %cst_17 : f32 to vector<2x32xf32>
    %51 = arith.addf %50, %49 : vector<2x32xf32>
    %52 = arith.divf %50, %51 : vector<2x32xf32>
    %53 = vector.extract_strided_slice %43 {offsets = [0, 32], sizes = [2, 32], strides = [1, 1]} : vector<2x96xf32> to vector<2x32xf32>
    %54 = vector.extract_strided_slice %44 {offsets = [0, 32], sizes = [2, 32], strides = [1, 1]} : vector<2x96xf32> to vector<2x32xf32>
    %55 = arith.addf %53, %54 : vector<2x32xf32>
    %56 = arith.negf %55 : vector<2x32xf32>
    %57 = math.exp %56 : vector<2x32xf32>
    %cst_18 = arith.constant 1.000000e+00 : f32
    %58 = vector.broadcast %cst_18 : f32 to vector<2x32xf32>
    %59 = arith.addf %58, %57 : vector<2x32xf32>
    %60 = arith.divf %58, %59 : vector<2x32xf32>
    %61 = vector.extract_strided_slice %43 {offsets = [0, 64], sizes = [2, 32], strides = [1, 1]} : vector<2x96xf32> to vector<2x32xf32>
    %62 = vector.extract_strided_slice %44 {offsets = [0, 64], sizes = [2, 32], strides = [1, 1]} : vector<2x96xf32> to vector<2x32xf32>
    %63 = arith.addf %62, %11 : vector<2x32xf32>
    %64 = arith.mulf %52, %63 : vector<2x32xf32>
    %65 = arith.addf %61, %64 : vector<2x32xf32>
    %66 = math.tanh %65 : vector<2x32xf32>
    %cst_19 = arith.constant 1.000000e+00 : f32
    %67 = vector.broadcast %cst_19 : f32 to vector<2x32xf32>
    %68 = arith.subf %67, %60 : vector<2x32xf32>
    %69 = arith.mulf %68, %66 : vector<2x32xf32>
    %70 = arith.mulf %60, %41 : vector<2x32xf32>
    %71 = arith.addf %69, %70 : vector<2x32xf32>
    %c2 = arith.constant 2 : index
    %c0_20 = arith.constant 0 : index
    %72 = vector.load %arg16[%c2, %c0_20] : memref<16x32xf32, #tpu.memory_space<vmem>>, vector<2x32xf32>
    tpu.vector_store %arg16[%c2, %c0_20], %71 {strides = array<i32>} : memref<16x32xf32, #tpu.memory_space<vmem>>, vector<2x32xf32>,
    %73 = vector.extract_strided_slice %7 {offsets = [4, 0], sizes = [2, 96], strides = [1, 1]} : vector<16x96xf32> to vector<2x96xf32>
    %cst_21 = arith.constant dense<0.000000e+00> : vector<2x96xf32>
    %74 = tpu.matmul %71, %8, %cst_21 {dimension_numbers = #tpu.dot_dimension_numbers<[1], [0], [0], [1], [0, 0, 1, 1], [], []>} : vector<2x32xf32>, vector<32x96xf32>, vector<2x96xf32> -> vector<2x96xf32>
    %75 = vector.extract_strided_slice %73 {offsets = [0, 0], sizes = [2, 32], strides = [1, 1]} : vector<2x96xf32> to vector<2x32xf32>
    %76 = vector.extract_strided_slice %74 {offsets = [0, 0], sizes = [2, 32], strides = [1, 1]} : vector<2x96xf32> to vector<2x32xf32>
    %77 = arith.addf %75, %76 : vector<2x32xf32>
    %78 = arith.negf %77 : vector<2x32xf32>
    %79 = math.exp %78 : vector<2x32xf32>
    %cst_22 = arith.constant 1.000000e+00 : f32
    %80 = vector.broadcast %cst_22 : f32 to vector<2x32xf32>
    %81 = arith.addf %80, %79 : vector<2x32xf32>
    %82 = arith.divf %80, %81 : vector<2x32xf32>
    %83 = vector.extract_strided_slice %73 {offsets = [0, 32], sizes = [2, 32], strides = [1, 1]} : vector<2x96xf32> to vector<2x32xf32>
    %84 = vector.extract_strided_slice %74 {offsets = [0, 32], sizes = [2, 32], strides = [1, 1]} : vector<2x96xf32> to vector<2x32xf32>
    %85 = arith.addf %83, %84 : vector<2x32xf32>
    %86 = arith.negf %85 : vector<2x32xf32>
    %87 = math.exp %86 : vector<2x32xf32>
    %cst_23 = arith.constant 1.000000e+00 : f32
    %88 = vector.broadcast %cst_23 : f32 to vector<2x32xf32>
    %89 = arith.addf %88, %87 : vector<2x32xf32>
    %90 = arith.divf %88, %89 : vector<2x32xf32>
    %91 = vector.extract_strided_slice %73 {offsets = [0, 64], sizes = [2, 32], strides = [1, 1]} : vector<2x96xf32> to vector<2x32xf32>
    %92 = vector.extract_strided_slice %74 {offsets = [0, 64], sizes = [2, 32], strides = [1, 1]} : vector<2x96xf32> to vector<2x32xf32>
    %93 = arith.addf %92, %11 : vector<2x32xf32>
    %94 = arith.mulf %82, %93 : vector<2x32xf32>
    %95 = arith.addf %91, %94 : vector<2x32xf32>
    %96 = math.tanh %95 : vector<2x32xf32>
    %cst_24 = arith.constant 1.000000e+00 : f32
    %97 = vector.broadcast %cst_24 : f32 to vector<2x32xf32>
    %98 = arith.subf %97, %90 : vector<2x32xf32>
    %99 = arith.mulf %98, %96 : vector<2x32xf32>
    %100 = arith.mulf %90, %71 : vector<2x32xf32>
    %101 = arith.addf %99, %100 : vector<2x32xf32>
    %c4 = arith.constant 4 : index
    %c0_25 = arith.constant 0 : index
    %102 = vector.load %arg16[%c4, %c0_25] : memref<16x32xf32, #tpu.memory_space<vmem>>, vector<2x32xf32>
    tpu.vector_store %arg16[%c4, %c0_25], %101 {strides = array<i32>} : memref<16x32xf32, #tpu.memory_space<vmem>>, vector<2x32xf32>,
    %103 = vector.extract_strided_slice %7 {offsets = [6, 0], sizes = [2, 96], strides = [1, 1]} : vector<16x96xf32> to vector<2x96xf32>
    %cst_26 = arith.constant dense<0.000000e+00> : vector<2x96xf32>
    %104 = tpu.matmul %101, %8, %cst_26 {dimension_numbers = #tpu.dot_dimension_numbers<[1], [0], [0], [1], [0, 0, 1, 1], [], []>} : vector<2x32xf32>, vector<32x96xf32>, vector<2x96xf32> -> vector<2x96xf32>
    %105 = vector.extract_strided_slice %103 {offsets = [0, 0], sizes = [2, 32], strides = [1, 1]} : vector<2x96xf32> to vector<2x32xf32>
    %106 = vector.extract_strided_slice %104 {offsets = [0, 0], sizes = [2, 32], strides = [1, 1]} : vector<2x96xf32> to vector<2x32xf32>
    %107 = arith.addf %105, %106 : vector<2x32xf32>
    %108 = arith.negf %107 : vector<2x32xf32>
    %109 = math.exp %108 : vector<2x32xf32>
    %cst_27 = arith.constant 1.000000e+00 : f32
    %110 = vector.broadcast %cst_27 : f32 to vector<2x32xf32>
    %111 = arith.addf %110, %109 : vector<2x32xf32>
    %112 = arith.divf %110, %111 : vector<2x32xf32>
    %113 = vector.extract_strided_slice %103 {offsets = [0, 32], sizes = [2, 32], strides = [1, 1]} : vector<2x96xf32> to vector<2x32xf32>
    %114 = vector.extract_strided_slice %104 {offsets = [0, 32], sizes = [2, 32], strides = [1, 1]} : vector<2x96xf32> to vector<2x32xf32>
    %115 = arith.addf %113, %114 : vector<2x32xf32>
    %116 = arith.negf %115 : vector<2x32xf32>
    %117 = math.exp %116 : vector<2x32xf32>
    %cst_28 = arith.constant 1.000000e+00 : f32
    %118 = vector.broadcast %cst_28 : f32 to vector<2x32xf32>
    %119 = arith.addf %118, %117 : vector<2x32xf32>
    %120 = arith.divf %118, %119 : vector<2x32xf32>
    %121 = vector.extract_strided_slice %103 {offsets = [0, 64], sizes = [2, 32], strides = [1, 1]} : vector<2x96xf32> to vector<2x32xf32>
    %122 = vector.extract_strided_slice %104 {offsets = [0, 64], sizes = [2, 32], strides = [1, 1]} : vector<2x96xf32> to vector<2x32xf32>
    %123 = arith.addf %122, %11 : vector<2x32xf32>
    %124 = arith.mulf %112, %123 : vector<2x32xf32>
    %125 = arith.addf %121, %124 : vector<2x32xf32>
    %126 = math.tanh %125 : vector<2x32xf32>
    %cst_29 = arith.constant 1.000000e+00 : f32
    %127 = vector.broadcast %cst_29 : f32 to vector<2x32xf32>
    %128 = arith.subf %127, %120 : vector<2x32xf32>
    %129 = arith.mulf %128, %126 : vector<2x32xf32>
    %130 = arith.mulf %120, %101 : vector<2x32xf32>
    %131 = arith.addf %129, %130 : vector<2x32xf32>
    %c6 = arith.constant 6 : index
    %c0_30 = arith.constant 0 : index
    %132 = vector.load %arg16[%c6, %c0_30] : memref<16x32xf32, #tpu.memory_space<vmem>>, vector<2x32xf32>
    tpu.vector_store %arg16[%c6, %c0_30], %131 {strides = array<i32>} : memref<16x32xf32, #tpu.memory_space<vmem>>, vector<2x32xf32>,
    %133 = vector.extract_strided_slice %7 {offsets = [8, 0], sizes = [2, 96], strides = [1, 1]} : vector<16x96xf32> to vector<2x96xf32>
    %cst_31 = arith.constant dense<0.000000e+00> : vector<2x96xf32>
    %134 = tpu.matmul %131, %8, %cst_31 {dimension_numbers = #tpu.dot_dimension_numbers<[1], [0], [0], [1], [0, 0, 1, 1], [], []>} : vector<2x32xf32>, vector<32x96xf32>, vector<2x96xf32> -> vector<2x96xf32>
    %135 = vector.extract_strided_slice %133 {offsets = [0, 0], sizes = [2, 32], strides = [1, 1]} : vector<2x96xf32> to vector<2x32xf32>
    %136 = vector.extract_strided_slice %134 {offsets = [0, 0], sizes = [2, 32], strides = [1, 1]} : vector<2x96xf32> to vector<2x32xf32>
    %137 = arith.addf %135, %136 : vector<2x32xf32>
    %138 = arith.negf %137 : vector<2x32xf32>
    %139 = math.exp %138 : vector<2x32xf32>
    %cst_32 = arith.constant 1.000000e+00 : f32
    %140 = vector.broadcast %cst_32 : f32 to vector<2x32xf32>
    %141 = arith.addf %140, %139 : vector<2x32xf32>
    %142 = arith.divf %140, %141 : vector<2x32xf32>
    %143 = vector.extract_strided_slice %133 {offsets = [0, 32], sizes = [2, 32], strides = [1, 1]} : vector<2x96xf32> to vector<2x32xf32>
    %144 = vector.extract_strided_slice %134 {offsets = [0, 32], sizes = [2, 32], strides = [1, 1]} : vector<2x96xf32> to vector<2x32xf32>
    %145 = arith.addf %143, %144 : vector<2x32xf32>
    %146 = arith.negf %145 : vector<2x32xf32>
    %147 = math.exp %146 : vector<2x32xf32>
    %cst_33 = arith.constant 1.000000e+00 : f32
    %148 = vector.broadcast %cst_33 : f32 to vector<2x32xf32>
    %149 = arith.addf %148, %147 : vector<2x32xf32>
    %150 = arith.divf %148, %149 : vector<2x32xf32>
    %151 = vector.extract_strided_slice %133 {offsets = [0, 64], sizes = [2, 32], strides = [1, 1]} : vector<2x96xf32> to vector<2x32xf32>
    %152 = vector.extract_strided_slice %134 {offsets = [0, 64], sizes = [2, 32], strides = [1, 1]} : vector<2x96xf32> to vector<2x32xf32>
    %153 = arith.addf %152, %11 : vector<2x32xf32>
    %154 = arith.mulf %142, %153 : vector<2x32xf32>
    %155 = arith.addf %151, %154 : vector<2x32xf32>
    %156 = math.tanh %155 : vector<2x32xf32>
    %cst_34 = arith.constant 1.000000e+00 : f32
    %157 = vector.broadcast %cst_34 : f32 to vector<2x32xf32>
    %158 = arith.subf %157, %150 : vector<2x32xf32>
    %159 = arith.mulf %158, %156 : vector<2x32xf32>
    %160 = arith.mulf %150, %131 : vector<2x32xf32>
    %161 = arith.addf %159, %160 : vector<2x32xf32>
    %c8 = arith.constant 8 : index
    %c0_35 = arith.constant 0 : index
    %162 = vector.load %arg16[%c8, %c0_35] : memref<16x32xf32, #tpu.memory_space<vmem>>, vector<2x32xf32>
    tpu.vector_store %arg16[%c8, %c0_35], %161 {strides = array<i32>} : memref<16x32xf32, #tpu.memory_space<vmem>>, vector<2x32xf32>,
    %163 = vector.extract_strided_slice %7 {offsets = [10, 0], sizes = [2, 96], strides = [1, 1]} : vector<16x96xf32> to vector<2x96xf32>
    %cst_36 = arith.constant dense<0.000000e+00> : vector<2x96xf32>
    %164 = tpu.matmul %161, %8, %cst_36 {dimension_numbers = #tpu.dot_dimension_numbers<[1], [0], [0], [1], [0, 0, 1, 1], [], []>} : vector<2x32xf32>, vector<32x96xf32>, vector<2x96xf32> -> vector<2x96xf32>
    %165 = vector.extract_strided_slice %163 {offsets = [0, 0], sizes = [2, 32], strides = [1, 1]} : vector<2x96xf32> to vector<2x32xf32>
    %166 = vector.extract_strided_slice %164 {offsets = [0, 0], sizes = [2, 32], strides = [1, 1]} : vector<2x96xf32> to vector<2x32xf32>
    %167 = arith.addf %165, %166 : vector<2x32xf32>
    %168 = arith.negf %167 : vector<2x32xf32>
    %169 = math.exp %168 : vector<2x32xf32>
    %cst_37 = arith.constant 1.000000e+00 : f32
    %170 = vector.broadcast %cst_37 : f32 to vector<2x32xf32>
    %171 = arith.addf %170, %169 : vector<2x32xf32>
    %172 = arith.divf %170, %171 : vector<2x32xf32>
    %173 = vector.extract_strided_slice %163 {offsets = [0, 32], sizes = [2, 32], strides = [1, 1]} : vector<2x96xf32> to vector<2x32xf32>
    %174 = vector.extract_strided_slice %164 {offsets = [0, 32], sizes = [2, 32], strides = [1, 1]} : vector<2x96xf32> to vector<2x32xf32>
    %175 = arith.addf %173, %174 : vector<2x32xf32>
    %176 = arith.negf %175 : vector<2x32xf32>
    %177 = math.exp %176 : vector<2x32xf32>
    %cst_38 = arith.constant 1.000000e+00 : f32
    %178 = vector.broadcast %cst_38 : f32 to vector<2x32xf32>
    %179 = arith.addf %178, %177 : vector<2x32xf32>
    %180 = arith.divf %178, %179 : vector<2x32xf32>
    %181 = vector.extract_strided_slice %163 {offsets = [0, 64], sizes = [2, 32], strides = [1, 1]} : vector<2x96xf32> to vector<2x32xf32>
    %182 = vector.extract_strided_slice %164 {offsets = [0, 64], sizes = [2, 32], strides = [1, 1]} : vector<2x96xf32> to vector<2x32xf32>
    %183 = arith.addf %182, %11 : vector<2x32xf32>
    %184 = arith.mulf %172, %183 : vector<2x32xf32>
    %185 = arith.addf %181, %184 : vector<2x32xf32>
    %186 = math.tanh %185 : vector<2x32xf32>
    %cst_39 = arith.constant 1.000000e+00 : f32
    %187 = vector.broadcast %cst_39 : f32 to vector<2x32xf32>
    %188 = arith.subf %187, %180 : vector<2x32xf32>
    %189 = arith.mulf %188, %186 : vector<2x32xf32>
    %190 = arith.mulf %180, %161 : vector<2x32xf32>
    %191 = arith.addf %189, %190 : vector<2x32xf32>
    %c10 = arith.constant 10 : index
    %c0_40 = arith.constant 0 : index
    %192 = vector.load %arg16[%c10, %c0_40] : memref<16x32xf32, #tpu.memory_space<vmem>>, vector<2x32xf32>
    tpu.vector_store %arg16[%c10, %c0_40], %191 {strides = array<i32>} : memref<16x32xf32, #tpu.memory_space<vmem>>, vector<2x32xf32>,
    %193 = vector.extract_strided_slice %7 {offsets = [12, 0], sizes = [2, 96], strides = [1, 1]} : vector<16x96xf32> to vector<2x96xf32>
    %cst_41 = arith.constant dense<0.000000e+00> : vector<2x96xf32>
    %194 = tpu.matmul %191, %8, %cst_41 {dimension_numbers = #tpu.dot_dimension_numbers<[1], [0], [0], [1], [0, 0, 1, 1], [], []>} : vector<2x32xf32>, vector<32x96xf32>, vector<2x96xf32> -> vector<2x96xf32>
    %195 = vector.extract_strided_slice %193 {offsets = [0, 0], sizes = [2, 32], strides = [1, 1]} : vector<2x96xf32> to vector<2x32xf32>
    %196 = vector.extract_strided_slice %194 {offsets = [0, 0], sizes = [2, 32], strides = [1, 1]} : vector<2x96xf32> to vector<2x32xf32>
    %197 = arith.addf %195, %196 : vector<2x32xf32>
    %198 = arith.negf %197 : vector<2x32xf32>
    %199 = math.exp %198 : vector<2x32xf32>
    %cst_42 = arith.constant 1.000000e+00 : f32
    %200 = vector.broadcast %cst_42 : f32 to vector<2x32xf32>
    %201 = arith.addf %200, %199 : vector<2x32xf32>
    %202 = arith.divf %200, %201 : vector<2x32xf32>
    %203 = vector.extract_strided_slice %193 {offsets = [0, 32], sizes = [2, 32], strides = [1, 1]} : vector<2x96xf32> to vector<2x32xf32>
    %204 = vector.extract_strided_slice %194 {offsets = [0, 32], sizes = [2, 32], strides = [1, 1]} : vector<2x96xf32> to vector<2x32xf32>
    %205 = arith.addf %203, %204 : vector<2x32xf32>
    %206 = arith.negf %205 : vector<2x32xf32>
    %207 = math.exp %206 : vector<2x32xf32>
    %cst_43 = arith.constant 1.000000e+00 : f32
    %208 = vector.broadcast %cst_43 : f32 to vector<2x32xf32>
    %209 = arith.addf %208, %207 : vector<2x32xf32>
    %210 = arith.divf %208, %209 : vector<2x32xf32>
    %211 = vector.extract_strided_slice %193 {offsets = [0, 64], sizes = [2, 32], strides = [1, 1]} : vector<2x96xf32> to vector<2x32xf32>
    %212 = vector.extract_strided_slice %194 {offsets = [0, 64], sizes = [2, 32], strides = [1, 1]} : vector<2x96xf32> to vector<2x32xf32>
    %213 = arith.addf %212, %11 : vector<2x32xf32>
    %214 = arith.mulf %202, %213 : vector<2x32xf32>
    %215 = arith.addf %211, %214 : vector<2x32xf32>
    %216 = math.tanh %215 : vector<2x32xf32>
    %cst_44 = arith.constant 1.000000e+00 : f32
    %217 = vector.broadcast %cst_44 : f32 to vector<2x32xf32>
    %218 = arith.subf %217, %210 : vector<2x32xf32>
    %219 = arith.mulf %218, %216 : vector<2x32xf32>
    %220 = arith.mulf %210, %191 : vector<2x32xf32>
    %221 = arith.addf %219, %220 : vector<2x32xf32>
    %c12 = arith.constant 12 : index
    %c0_45 = arith.constant 0 : index
    %222 = vector.load %arg16[%c12, %c0_45] : memref<16x32xf32, #tpu.memory_space<vmem>>, vector<2x32xf32>
    tpu.vector_store %arg16[%c12, %c0_45], %221 {strides = array<i32>} : memref<16x32xf32, #tpu.memory_space<vmem>>, vector<2x32xf32>,
    %223 = vector.extract_strided_slice %7 {offsets = [14, 0], sizes = [2, 96], strides = [1, 1]} : vector<16x96xf32> to vector<2x96xf32>
    %cst_46 = arith.constant dense<0.000000e+00> : vector<2x96xf32>
    %224 = tpu.matmul %221, %8, %cst_46 {dimension_numbers = #tpu.dot_dimension_numbers<[1], [0], [0], [1], [0, 0, 1, 1], [], []>} : vector<2x32xf32>, vector<32x96xf32>, vector<2x96xf32> -> vector<2x96xf32>
    %225 = vector.extract_strided_slice %223 {offsets = [0, 0], sizes = [2, 32], strides = [1, 1]} : vector<2x96xf32> to vector<2x32xf32>
    %226 = vector.extract_strided_slice %224 {offsets = [0, 0], sizes = [2, 32], strides = [1, 1]} : vector<2x96xf32> to vector<2x32xf32>
    %227 = arith.addf %225, %226 : vector<2x32xf32>
    %228 = arith.negf %227 : vector<2x32xf32>
    %229 = math.exp %228 : vector<2x32xf32>
    %cst_47 = arith.constant 1.000000e+00 : f32
    %230 = vector.broadcast %cst_47 : f32 to vector<2x32xf32>
    %231 = arith.addf %230, %229 : vector<2x32xf32>
    %232 = arith.divf %230, %231 : vector<2x32xf32>
    %233 = vector.extract_strided_slice %223 {offsets = [0, 32], sizes = [2, 32], strides = [1, 1]} : vector<2x96xf32> to vector<2x32xf32>
    %234 = vector.extract_strided_slice %224 {offsets = [0, 32], sizes = [2, 32], strides = [1, 1]} : vector<2x96xf32> to vector<2x32xf32>
    %235 = arith.addf %233, %234 : vector<2x32xf32>
    %236 = arith.negf %235 : vector<2x32xf32>
    %237 = math.exp %236 : vector<2x32xf32>
    %cst_48 = arith.constant 1.000000e+00 : f32
    %238 = vector.broadcast %cst_48 : f32 to vector<2x32xf32>
    %239 = arith.addf %238, %237 : vector<2x32xf32>
    %240 = arith.divf %238, %239 : vector<2x32xf32>
    %241 = vector.extract_strided_slice %223 {offsets = [0, 64], sizes = [2, 32], strides = [1, 1]} : vector<2x96xf32> to vector<2x32xf32>
    %242 = vector.extract_strided_slice %224 {offsets = [0, 64], sizes = [2, 32], strides = [1, 1]} : vector<2x96xf32> to vector<2x32xf32>
    %243 = arith.addf %242, %11 : vector<2x32xf32>
    %244 = arith.mulf %232, %243 : vector<2x32xf32>
    %245 = arith.addf %241, %244 : vector<2x32xf32>
    %246 = math.tanh %245 : vector<2x32xf32>
    %cst_49 = arith.constant 1.000000e+00 : f32
    %247 = vector.broadcast %cst_49 : f32 to vector<2x32xf32>
    %248 = arith.subf %247, %240 : vector<2x32xf32>
    %249 = arith.mulf %248, %246 : vector<2x32xf32>
    %250 = arith.mulf %240, %221 : vector<2x32xf32>
    %251 = arith.addf %249, %250 : vector<2x32xf32>
    %c14 = arith.constant 14 : index
    %c0_50 = arith.constant 0 : index
    %252 = vector.load %arg16[%c14, %c0_50] : memref<16x32xf32, #tpu.memory_space<vmem>>, vector<2x32xf32>
    tpu.vector_store %arg16[%c14, %c0_50], %251 {strides = array<i32>} : memref<16x32xf32, #tpu.memory_space<vmem>>, vector<2x32xf32>,
    %c0_51 = arith.constant 0 : index
    %c0_52 = arith.constant 0 : index
    %253 = vector.load %arg14[%c0_51, %c0_52] : memref<2x32xf32, #tpu.memory_space<vmem>>, vector<2x32xf32>
    tpu.vector_store %arg14[%c0_51, %c0_52], %251 {strides = array<i32>} : memref<2x32xf32, #tpu.memory_space<vmem>>, vector<2x32xf32>,
    %c0_53 = arith.constant 0 : index
    %c0_54 = arith.constant 0 : index
    %254 = vector.load %arg16[%c0_53, %c0_54] : memref<16x32xf32, #tpu.memory_space<vmem>>, vector<16x32xf32>
    %c0_55 = arith.constant 0 : index
    %c0_56 = arith.constant 0 : index
    %255 = vector.load %arg6[%c0_55, %c0_56] : memref<32x48xf32, #tpu.memory_space<vmem>>, vector<32x48xf32>
    %cst_57 = arith.constant dense<0.000000e+00> : vector<16x48xf32>
    %256 = tpu.matmul %254, %255, %cst_57 {dimension_numbers = #tpu.dot_dimension_numbers<[1], [0], [0], [1], [0, 0, 1, 1], [], []>} : vector<16x32xf32>, vector<32x48xf32>, vector<16x48xf32> -> vector<16x48xf32>
    %c0_58 = arith.constant 0 : index
    %c0_59 = arith.constant 0 : index
    %257 = vector.load %arg8[%c0_58, %c0_59] : memref<1x48xf32, #tpu.memory_space<vmem>>, vector<1x48xf32>
    %258 = vector.broadcast %257 : vector<1x48xf32> to vector<16x48xf32>
    %259 = arith.addf %256, %258 : vector<16x48xf32>
    %c0_60 = arith.constant 0 : index
    %c0_61 = arith.constant 0 : index
    %260 = vector.load %arg7[%c0_60, %c0_61] : memref<16x48xf32, #tpu.memory_space<vmem>>, vector<16x48xf32>
    %c0_62 = arith.constant 0 : index
    %c0_63 = arith.constant 0 : index
    %261 = vector.load %arg9[%c0_62, %c0_63] : memref<1x16xf32, #tpu.memory_space<vmem>>, vector<1x16xf32>
    %262 = vector.shape_cast %261 : vector<1x16xf32> to vector<1x16xf32>
    %263 = vector.broadcast %262 : vector<1x16xf32> to vector<2x16xf32>
    %c0_64 = arith.constant 0 : index
    %c0_65 = arith.constant 0 : index
    %264 = vector.load %arg10[%c0_64, %c0_65] : memref<2x16xf32, #tpu.memory_space<vmem>>, vector<2x16xf32>
    %265 = vector.extract_strided_slice %259 {offsets = [0, 0], sizes = [2, 48], strides = [1, 1]} : vector<16x48xf32> to vector<2x48xf32>
    %cst_66 = arith.constant dense<0.000000e+00> : vector<2x48xf32>
    %266 = tpu.matmul %264, %260, %cst_66 {dimension_numbers = #tpu.dot_dimension_numbers<[1], [0], [0], [1], [0, 0, 1, 1], [], []>} : vector<2x16xf32>, vector<16x48xf32>, vector<2x48xf32> -> vector<2x48xf32>
    %267 = vector.extract_strided_slice %265 {offsets = [0, 0], sizes = [2, 16], strides = [1, 1]} : vector<2x48xf32> to vector<2x16xf32>
    %268 = vector.extract_strided_slice %266 {offsets = [0, 0], sizes = [2, 16], strides = [1, 1]} : vector<2x48xf32> to vector<2x16xf32>
    %269 = arith.addf %267, %268 : vector<2x16xf32>
    %270 = arith.negf %269 : vector<2x16xf32>
    %271 = math.exp %270 : vector<2x16xf32>
    %cst_67 = arith.constant 1.000000e+00 : f32
    %272 = vector.broadcast %cst_67 : f32 to vector<2x16xf32>
    %273 = arith.addf %272, %271 : vector<2x16xf32>
    %274 = arith.divf %272, %273 : vector<2x16xf32>
    %275 = vector.extract_strided_slice %265 {offsets = [0, 16], sizes = [2, 16], strides = [1, 1]} : vector<2x48xf32> to vector<2x16xf32>
    %276 = vector.extract_strided_slice %266 {offsets = [0, 16], sizes = [2, 16], strides = [1, 1]} : vector<2x48xf32> to vector<2x16xf32>
    %277 = arith.addf %275, %276 : vector<2x16xf32>
    %278 = arith.negf %277 : vector<2x16xf32>
    %279 = math.exp %278 : vector<2x16xf32>
    %cst_68 = arith.constant 1.000000e+00 : f32
    %280 = vector.broadcast %cst_68 : f32 to vector<2x16xf32>
    %281 = arith.addf %280, %279 : vector<2x16xf32>
    %282 = arith.divf %280, %281 : vector<2x16xf32>
    %283 = vector.extract_strided_slice %265 {offsets = [0, 32], sizes = [2, 16], strides = [1, 1]} : vector<2x48xf32> to vector<2x16xf32>
    %284 = vector.extract_strided_slice %266 {offsets = [0, 32], sizes = [2, 16], strides = [1, 1]} : vector<2x48xf32> to vector<2x16xf32>
    %285 = arith.addf %284, %263 : vector<2x16xf32>
    %286 = arith.mulf %274, %285 : vector<2x16xf32>
    %287 = arith.addf %283, %286 : vector<2x16xf32>
    %288 = math.tanh %287 : vector<2x16xf32>
    %cst_69 = arith.constant 1.000000e+00 : f32
    %289 = vector.broadcast %cst_69 : f32 to vector<2x16xf32>
    %290 = arith.subf %289, %282 : vector<2x16xf32>
    %291 = arith.mulf %290, %288 : vector<2x16xf32>
    %292 = arith.mulf %282, %264 : vector<2x16xf32>
    %293 = arith.addf %291, %292 : vector<2x16xf32>
    %294 = vector.extract_strided_slice %259 {offsets = [2, 0], sizes = [2, 48], strides = [1, 1]} : vector<16x48xf32> to vector<2x48xf32>
    %cst_70 = arith.constant dense<0.000000e+00> : vector<2x48xf32>
    %295 = tpu.matmul %293, %260, %cst_70 {dimension_numbers = #tpu.dot_dimension_numbers<[1], [0], [0], [1], [0, 0, 1, 1], [], []>} : vector<2x16xf32>, vector<16x48xf32>, vector<2x48xf32> -> vector<2x48xf32>
    %296 = vector.extract_strided_slice %294 {offsets = [0, 0], sizes = [2, 16], strides = [1, 1]} : vector<2x48xf32> to vector<2x16xf32>
    %297 = vector.extract_strided_slice %295 {offsets = [0, 0], sizes = [2, 16], strides = [1, 1]} : vector<2x48xf32> to vector<2x16xf32>
    %298 = arith.addf %296, %297 : vector<2x16xf32>
    %299 = arith.negf %298 : vector<2x16xf32>
    %300 = math.exp %299 : vector<2x16xf32>
    %cst_71 = arith.constant 1.000000e+00 : f32
    %301 = vector.broadcast %cst_71 : f32 to vector<2x16xf32>
    %302 = arith.addf %301, %300 : vector<2x16xf32>
    %303 = arith.divf %301, %302 : vector<2x16xf32>
    %304 = vector.extract_strided_slice %294 {offsets = [0, 16], sizes = [2, 16], strides = [1, 1]} : vector<2x48xf32> to vector<2x16xf32>
    %305 = vector.extract_strided_slice %295 {offsets = [0, 16], sizes = [2, 16], strides = [1, 1]} : vector<2x48xf32> to vector<2x16xf32>
    %306 = arith.addf %304, %305 : vector<2x16xf32>
    %307 = arith.negf %306 : vector<2x16xf32>
    %308 = math.exp %307 : vector<2x16xf32>
    %cst_72 = arith.constant 1.000000e+00 : f32
    %309 = vector.broadcast %cst_72 : f32 to vector<2x16xf32>
    %310 = arith.addf %309, %308 : vector<2x16xf32>
    %311 = arith.divf %309, %310 : vector<2x16xf32>
    %312 = vector.extract_strided_slice %294 {offsets = [0, 32], sizes = [2, 16], strides = [1, 1]} : vector<2x48xf32> to vector<2x16xf32>
    %313 = vector.extract_strided_slice %295 {offsets = [0, 32], sizes = [2, 16], strides = [1, 1]} : vector<2x48xf32> to vector<2x16xf32>
    %314 = arith.addf %313, %263 : vector<2x16xf32>
    %315 = arith.mulf %303, %314 : vector<2x16xf32>
    %316 = arith.addf %312, %315 : vector<2x16xf32>
    %317 = math.tanh %316 : vector<2x16xf32>
    %cst_73 = arith.constant 1.000000e+00 : f32
    %318 = vector.broadcast %cst_73 : f32 to vector<2x16xf32>
    %319 = arith.subf %318, %311 : vector<2x16xf32>
    %320 = arith.mulf %319, %317 : vector<2x16xf32>
    %321 = arith.mulf %311, %293 : vector<2x16xf32>
    %322 = arith.addf %320, %321 : vector<2x16xf32>
    %323 = vector.extract_strided_slice %259 {offsets = [4, 0], sizes = [2, 48], strides = [1, 1]} : vector<16x48xf32> to vector<2x48xf32>
    %cst_74 = arith.constant dense<0.000000e+00> : vector<2x48xf32>
    %324 = tpu.matmul %322, %260, %cst_74 {dimension_numbers = #tpu.dot_dimension_numbers<[1], [0], [0], [1], [0, 0, 1, 1], [], []>} : vector<2x16xf32>, vector<16x48xf32>, vector<2x48xf32> -> vector<2x48xf32>
    %325 = vector.extract_strided_slice %323 {offsets = [0, 0], sizes = [2, 16], strides = [1, 1]} : vector<2x48xf32> to vector<2x16xf32>
    %326 = vector.extract_strided_slice %324 {offsets = [0, 0], sizes = [2, 16], strides = [1, 1]} : vector<2x48xf32> to vector<2x16xf32>
    %327 = arith.addf %325, %326 : vector<2x16xf32>
    %328 = arith.negf %327 : vector<2x16xf32>
    %329 = math.exp %328 : vector<2x16xf32>
    %cst_75 = arith.constant 1.000000e+00 : f32
    %330 = vector.broadcast %cst_75 : f32 to vector<2x16xf32>
    %331 = arith.addf %330, %329 : vector<2x16xf32>
    %332 = arith.divf %330, %331 : vector<2x16xf32>
    %333 = vector.extract_strided_slice %323 {offsets = [0, 16], sizes = [2, 16], strides = [1, 1]} : vector<2x48xf32> to vector<2x16xf32>
    %334 = vector.extract_strided_slice %324 {offsets = [0, 16], sizes = [2, 16], strides = [1, 1]} : vector<2x48xf32> to vector<2x16xf32>
    %335 = arith.addf %333, %334 : vector<2x16xf32>
    %336 = arith.negf %335 : vector<2x16xf32>
    %337 = math.exp %336 : vector<2x16xf32>
    %cst_76 = arith.constant 1.000000e+00 : f32
    %338 = vector.broadcast %cst_76 : f32 to vector<2x16xf32>
    %339 = arith.addf %338, %337 : vector<2x16xf32>
    %340 = arith.divf %338, %339 : vector<2x16xf32>
    %341 = vector.extract_strided_slice %323 {offsets = [0, 32], sizes = [2, 16], strides = [1, 1]} : vector<2x48xf32> to vector<2x16xf32>
    %342 = vector.extract_strided_slice %324 {offsets = [0, 32], sizes = [2, 16], strides = [1, 1]} : vector<2x48xf32> to vector<2x16xf32>
    %343 = arith.addf %342, %263 : vector<2x16xf32>
    %344 = arith.mulf %332, %343 : vector<2x16xf32>
    %345 = arith.addf %341, %344 : vector<2x16xf32>
    %346 = math.tanh %345 : vector<2x16xf32>
    %cst_77 = arith.constant 1.000000e+00 : f32
    %347 = vector.broadcast %cst_77 : f32 to vector<2x16xf32>
    %348 = arith.subf %347, %340 : vector<2x16xf32>
    %349 = arith.mulf %348, %346 : vector<2x16xf32>
    %350 = arith.mulf %340, %322 : vector<2x16xf32>
    %351 = arith.addf %349, %350 : vector<2x16xf32>
    %352 = vector.extract_strided_slice %259 {offsets = [6, 0], sizes = [2, 48], strides = [1, 1]} : vector<16x48xf32> to vector<2x48xf32>
    %cst_78 = arith.constant dense<0.000000e+00> : vector<2x48xf32>
    %353 = tpu.matmul %351, %260, %cst_78 {dimension_numbers = #tpu.dot_dimension_numbers<[1], [0], [0], [1], [0, 0, 1, 1], [], []>} : vector<2x16xf32>, vector<16x48xf32>, vector<2x48xf32> -> vector<2x48xf32>
    %354 = vector.extract_strided_slice %352 {offsets = [0, 0], sizes = [2, 16], strides = [1, 1]} : vector<2x48xf32> to vector<2x16xf32>
    %355 = vector.extract_strided_slice %353 {offsets = [0, 0], sizes = [2, 16], strides = [1, 1]} : vector<2x48xf32> to vector<2x16xf32>
    %356 = arith.addf %354, %355 : vector<2x16xf32>
    %357 = arith.negf %356 : vector<2x16xf32>
    %358 = math.exp %357 : vector<2x16xf32>
    %cst_79 = arith.constant 1.000000e+00 : f32
    %359 = vector.broadcast %cst_79 : f32 to vector<2x16xf32>
    %360 = arith.addf %359, %358 : vector<2x16xf32>
    %361 = arith.divf %359, %360 : vector<2x16xf32>
    %362 = vector.extract_strided_slice %352 {offsets = [0, 16], sizes = [2, 16], strides = [1, 1]} : vector<2x48xf32> to vector<2x16xf32>
    %363 = vector.extract_strided_slice %353 {offsets = [0, 16], sizes = [2, 16], strides = [1, 1]} : vector<2x48xf32> to vector<2x16xf32>
    %364 = arith.addf %362, %363 : vector<2x16xf32>
    %365 = arith.negf %364 : vector<2x16xf32>
    %366 = math.exp %365 : vector<2x16xf32>
    %cst_80 = arith.constant 1.000000e+00 : f32
    %367 = vector.broadcast %cst_80 : f32 to vector<2x16xf32>
    %368 = arith.addf %367, %366 : vector<2x16xf32>
    %369 = arith.divf %367, %368 : vector<2x16xf32>
    %370 = vector.extract_strided_slice %352 {offsets = [0, 32], sizes = [2, 16], strides = [1, 1]} : vector<2x48xf32> to vector<2x16xf32>
    %371 = vector.extract_strided_slice %353 {offsets = [0, 32], sizes = [2, 16], strides = [1, 1]} : vector<2x48xf32> to vector<2x16xf32>
    %372 = arith.addf %371, %263 : vector<2x16xf32>
    %373 = arith.mulf %361, %372 : vector<2x16xf32>
    %374 = arith.addf %370, %373 : vector<2x16xf32>
    %375 = math.tanh %374 : vector<2x16xf32>
    %cst_81 = arith.constant 1.000000e+00 : f32
    %376 = vector.broadcast %cst_81 : f32 to vector<2x16xf32>
    %377 = arith.subf %376, %369 : vector<2x16xf32>
    %378 = arith.mulf %377, %375 : vector<2x16xf32>
    %379 = arith.mulf %369, %351 : vector<2x16xf32>
    %380 = arith.addf %378, %379 : vector<2x16xf32>
    %381 = vector.extract_strided_slice %259 {offsets = [8, 0], sizes = [2, 48], strides = [1, 1]} : vector<16x48xf32> to vector<2x48xf32>
    %cst_82 = arith.constant dense<0.000000e+00> : vector<2x48xf32>
    %382 = tpu.matmul %380, %260, %cst_82 {dimension_numbers = #tpu.dot_dimension_numbers<[1], [0], [0], [1], [0, 0, 1, 1], [], []>} : vector<2x16xf32>, vector<16x48xf32>, vector<2x48xf32> -> vector<2x48xf32>
    %383 = vector.extract_strided_slice %381 {offsets = [0, 0], sizes = [2, 16], strides = [1, 1]} : vector<2x48xf32> to vector<2x16xf32>
    %384 = vector.extract_strided_slice %382 {offsets = [0, 0], sizes = [2, 16], strides = [1, 1]} : vector<2x48xf32> to vector<2x16xf32>
    %385 = arith.addf %383, %384 : vector<2x16xf32>
    %386 = arith.negf %385 : vector<2x16xf32>
    %387 = math.exp %386 : vector<2x16xf32>
    %cst_83 = arith.constant 1.000000e+00 : f32
    %388 = vector.broadcast %cst_83 : f32 to vector<2x16xf32>
    %389 = arith.addf %388, %387 : vector<2x16xf32>
    %390 = arith.divf %388, %389 : vector<2x16xf32>
    %391 = vector.extract_strided_slice %381 {offsets = [0, 16], sizes = [2, 16], strides = [1, 1]} : vector<2x48xf32> to vector<2x16xf32>
    %392 = vector.extract_strided_slice %382 {offsets = [0, 16], sizes = [2, 16], strides = [1, 1]} : vector<2x48xf32> to vector<2x16xf32>
    %393 = arith.addf %391, %392 : vector<2x16xf32>
    %394 = arith.negf %393 : vector<2x16xf32>
    %395 = math.exp %394 : vector<2x16xf32>
    %cst_84 = arith.constant 1.000000e+00 : f32
    %396 = vector.broadcast %cst_84 : f32 to vector<2x16xf32>
    %397 = arith.addf %396, %395 : vector<2x16xf32>
    %398 = arith.divf %396, %397 : vector<2x16xf32>
    %399 = vector.extract_strided_slice %381 {offsets = [0, 32], sizes = [2, 16], strides = [1, 1]} : vector<2x48xf32> to vector<2x16xf32>
    %400 = vector.extract_strided_slice %382 {offsets = [0, 32], sizes = [2, 16], strides = [1, 1]} : vector<2x48xf32> to vector<2x16xf32>
    %401 = arith.addf %400, %263 : vector<2x16xf32>
    %402 = arith.mulf %390, %401 : vector<2x16xf32>
    %403 = arith.addf %399, %402 : vector<2x16xf32>
    %404 = math.tanh %403 : vector<2x16xf32>
    %cst_85 = arith.constant 1.000000e+00 : f32
    %405 = vector.broadcast %cst_85 : f32 to vector<2x16xf32>
    %406 = arith.subf %405, %398 : vector<2x16xf32>
    %407 = arith.mulf %406, %404 : vector<2x16xf32>
    %408 = arith.mulf %398, %380 : vector<2x16xf32>
    %409 = arith.addf %407, %408 : vector<2x16xf32>
    %410 = vector.extract_strided_slice %259 {offsets = [10, 0], sizes = [2, 48], strides = [1, 1]} : vector<16x48xf32> to vector<2x48xf32>
    %cst_86 = arith.constant dense<0.000000e+00> : vector<2x48xf32>
    %411 = tpu.matmul %409, %260, %cst_86 {dimension_numbers = #tpu.dot_dimension_numbers<[1], [0], [0], [1], [0, 0, 1, 1], [], []>} : vector<2x16xf32>, vector<16x48xf32>, vector<2x48xf32> -> vector<2x48xf32>
    %412 = vector.extract_strided_slice %410 {offsets = [0, 0], sizes = [2, 16], strides = [1, 1]} : vector<2x48xf32> to vector<2x16xf32>
    %413 = vector.extract_strided_slice %411 {offsets = [0, 0], sizes = [2, 16], strides = [1, 1]} : vector<2x48xf32> to vector<2x16xf32>
    %414 = arith.addf %412, %413 : vector<2x16xf32>
    %415 = arith.negf %414 : vector<2x16xf32>
    %416 = math.exp %415 : vector<2x16xf32>
    %cst_87 = arith.constant 1.000000e+00 : f32
    %417 = vector.broadcast %cst_87 : f32 to vector<2x16xf32>
    %418 = arith.addf %417, %416 : vector<2x16xf32>
    %419 = arith.divf %417, %418 : vector<2x16xf32>
    %420 = vector.extract_strided_slice %410 {offsets = [0, 16], sizes = [2, 16], strides = [1, 1]} : vector<2x48xf32> to vector<2x16xf32>
    %421 = vector.extract_strided_slice %411 {offsets = [0, 16], sizes = [2, 16], strides = [1, 1]} : vector<2x48xf32> to vector<2x16xf32>
    %422 = arith.addf %420, %421 : vector<2x16xf32>
    %423 = arith.negf %422 : vector<2x16xf32>
    %424 = math.exp %423 : vector<2x16xf32>
    %cst_88 = arith.constant 1.000000e+00 : f32
    %425 = vector.broadcast %cst_88 : f32 to vector<2x16xf32>
    %426 = arith.addf %425, %424 : vector<2x16xf32>
    %427 = arith.divf %425, %426 : vector<2x16xf32>
    %428 = vector.extract_strided_slice %410 {offsets = [0, 32], sizes = [2, 16], strides = [1, 1]} : vector<2x48xf32> to vector<2x16xf32>
    %429 = vector.extract_strided_slice %411 {offsets = [0, 32], sizes = [2, 16], strides = [1, 1]} : vector<2x48xf32> to vector<2x16xf32>
    %430 = arith.addf %429, %263 : vector<2x16xf32>
    %431 = arith.mulf %419, %430 : vector<2x16xf32>
    %432 = arith.addf %428, %431 : vector<2x16xf32>
    %433 = math.tanh %432 : vector<2x16xf32>
    %cst_89 = arith.constant 1.000000e+00 : f32
    %434 = vector.broadcast %cst_89 : f32 to vector<2x16xf32>
    %435 = arith.subf %434, %427 : vector<2x16xf32>
    %436 = arith.mulf %435, %433 : vector<2x16xf32>
    %437 = arith.mulf %427, %409 : vector<2x16xf32>
    %438 = arith.addf %436, %437 : vector<2x16xf32>
    %439 = vector.extract_strided_slice %259 {offsets = [12, 0], sizes = [2, 48], strides = [1, 1]} : vector<16x48xf32> to vector<2x48xf32>
    %cst_90 = arith.constant dense<0.000000e+00> : vector<2x48xf32>
    %440 = tpu.matmul %438, %260, %cst_90 {dimension_numbers = #tpu.dot_dimension_numbers<[1], [0], [0], [1], [0, 0, 1, 1], [], []>} : vector<2x16xf32>, vector<16x48xf32>, vector<2x48xf32> -> vector<2x48xf32>
    %441 = vector.extract_strided_slice %439 {offsets = [0, 0], sizes = [2, 16], strides = [1, 1]} : vector<2x48xf32> to vector<2x16xf32>
    %442 = vector.extract_strided_slice %440 {offsets = [0, 0], sizes = [2, 16], strides = [1, 1]} : vector<2x48xf32> to vector<2x16xf32>
    %443 = arith.addf %441, %442 : vector<2x16xf32>
    %444 = arith.negf %443 : vector<2x16xf32>
    %445 = math.exp %444 : vector<2x16xf32>
    %cst_91 = arith.constant 1.000000e+00 : f32
    %446 = vector.broadcast %cst_91 : f32 to vector<2x16xf32>
    %447 = arith.addf %446, %445 : vector<2x16xf32>
    %448 = arith.divf %446, %447 : vector<2x16xf32>
    %449 = vector.extract_strided_slice %439 {offsets = [0, 16], sizes = [2, 16], strides = [1, 1]} : vector<2x48xf32> to vector<2x16xf32>
    %450 = vector.extract_strided_slice %440 {offsets = [0, 16], sizes = [2, 16], strides = [1, 1]} : vector<2x48xf32> to vector<2x16xf32>
    %451 = arith.addf %449, %450 : vector<2x16xf32>
    %452 = arith.negf %451 : vector<2x16xf32>
    %453 = math.exp %452 : vector<2x16xf32>
    %cst_92 = arith.constant 1.000000e+00 : f32
    %454 = vector.broadcast %cst_92 : f32 to vector<2x16xf32>
    %455 = arith.addf %454, %453 : vector<2x16xf32>
    %456 = arith.divf %454, %455 : vector<2x16xf32>
    %457 = vector.extract_strided_slice %439 {offsets = [0, 32], sizes = [2, 16], strides = [1, 1]} : vector<2x48xf32> to vector<2x16xf32>
    %458 = vector.extract_strided_slice %440 {offsets = [0, 32], sizes = [2, 16], strides = [1, 1]} : vector<2x48xf32> to vector<2x16xf32>
    %459 = arith.addf %458, %263 : vector<2x16xf32>
    %460 = arith.mulf %448, %459 : vector<2x16xf32>
    %461 = arith.addf %457, %460 : vector<2x16xf32>
    %462 = math.tanh %461 : vector<2x16xf32>
    %cst_93 = arith.constant 1.000000e+00 : f32
    %463 = vector.broadcast %cst_93 : f32 to vector<2x16xf32>
    %464 = arith.subf %463, %456 : vector<2x16xf32>
    %465 = arith.mulf %464, %462 : vector<2x16xf32>
    %466 = arith.mulf %456, %438 : vector<2x16xf32>
    %467 = arith.addf %465, %466 : vector<2x16xf32>
    %468 = vector.extract_strided_slice %259 {offsets = [14, 0], sizes = [2, 48], strides = [1, 1]} : vector<16x48xf32> to vector<2x48xf32>
    %cst_94 = arith.constant dense<0.000000e+00> : vector<2x48xf32>
    %469 = tpu.matmul %467, %260, %cst_94 {dimension_numbers = #tpu.dot_dimension_numbers<[1], [0], [0], [1], [0, 0, 1, 1], [], []>} : vector<2x16xf32>, vector<16x48xf32>, vector<2x48xf32> -> vector<2x48xf32>
    %470 = vector.extract_strided_slice %468 {offsets = [0, 0], sizes = [2, 16], strides = [1, 1]} : vector<2x48xf32> to vector<2x16xf32>
    %471 = vector.extract_strided_slice %469 {offsets = [0, 0], sizes = [2, 16], strides = [1, 1]} : vector<2x48xf32> to vector<2x16xf32>
    %472 = arith.addf %470, %471 : vector<2x16xf32>
    %473 = arith.negf %472 : vector<2x16xf32>
    %474 = math.exp %473 : vector<2x16xf32>
    %cst_95 = arith.constant 1.000000e+00 : f32
    %475 = vector.broadcast %cst_95 : f32 to vector<2x16xf32>
    %476 = arith.addf %475, %474 : vector<2x16xf32>
    %477 = arith.divf %475, %476 : vector<2x16xf32>
    %478 = vector.extract_strided_slice %468 {offsets = [0, 16], sizes = [2, 16], strides = [1, 1]} : vector<2x48xf32> to vector<2x16xf32>
    %479 = vector.extract_strided_slice %469 {offsets = [0, 16], sizes = [2, 16], strides = [1, 1]} : vector<2x48xf32> to vector<2x16xf32>
    %480 = arith.addf %478, %479 : vector<2x16xf32>
    %481 = arith.negf %480 : vector<2x16xf32>
    %482 = math.exp %481 : vector<2x16xf32>
    %cst_96 = arith.constant 1.000000e+00 : f32
    %483 = vector.broadcast %cst_96 : f32 to vector<2x16xf32>
    %484 = arith.addf %483, %482 : vector<2x16xf32>
    %485 = arith.divf %483, %484 : vector<2x16xf32>
    %486 = vector.extract_strided_slice %468 {offsets = [0, 32], sizes = [2, 16], strides = [1, 1]} : vector<2x48xf32> to vector<2x16xf32>
    %487 = vector.extract_strided_slice %469 {offsets = [0, 32], sizes = [2, 16], strides = [1, 1]} : vector<2x48xf32> to vector<2x16xf32>
    %488 = arith.addf %487, %263 : vector<2x16xf32>
    %489 = arith.mulf %477, %488 : vector<2x16xf32>
    %490 = arith.addf %486, %489 : vector<2x16xf32>
    %491 = math.tanh %490 : vector<2x16xf32>
    %cst_97 = arith.constant 1.000000e+00 : f32
    %492 = vector.broadcast %cst_97 : f32 to vector<2x16xf32>
    %493 = arith.subf %492, %485 : vector<2x16xf32>
    %494 = arith.mulf %493, %491 : vector<2x16xf32>
    %495 = arith.mulf %485, %467 : vector<2x16xf32>
    %496 = arith.addf %494, %495 : vector<2x16xf32>
    %c0_98 = arith.constant 0 : index
    %c0_99 = arith.constant 0 : index
    %497 = vector.load %arg15[%c0_98, %c0_99] : memref<2x16xf32, #tpu.memory_space<vmem>>, vector<2x16xf32>
    tpu.vector_store %arg15[%c0_98, %c0_99], %496 {strides = array<i32>} : memref<2x16xf32, #tpu.memory_space<vmem>>, vector<2x16xf32>,
    %c0_100 = arith.constant 0 : index
    %c0_101 = arith.constant 0 : index
    %498 = vector.load %arg11[%c0_100, %c0_101] : memref<16x16xf32, #tpu.memory_space<vmem>>, vector<16x16xf32>
    %cst_102 = arith.constant dense<0.000000e+00> : vector<2x16xf32>
    %499 = tpu.matmul %496, %498, %cst_102 {dimension_numbers = #tpu.dot_dimension_numbers<[1], [0], [0], [1], [0, 0, 1, 1], [], []>} : vector<2x16xf32>, vector<16x16xf32>, vector<2x16xf32> -> vector<2x16xf32>
    %c0_103 = arith.constant 0 : index
    %c0_104 = arith.constant 0 : index
    %500 = vector.load %arg12[%c0_103, %c0_104] : memref<1x16xf32, #tpu.memory_space<vmem>>, vector<1x16xf32>
    %501 = vector.broadcast %500 : vector<1x16xf32> to vector<2x16xf32>
    %502 = arith.addf %499, %501 : vector<2x16xf32>
    %503 = math.tanh %502 : vector<2x16xf32>
    %c0_105 = arith.constant 0 : index
    %c0_106 = arith.constant 0 : index
    %504 = vector.load %arg13[%c0_105, %c0_106] : memref<2x16xf32, #tpu.memory_space<vmem>>, vector<2x16xf32>
    tpu.vector_store %arg13[%c0_105, %c0_106], %503 {strides = array<i32>} : memref<2x16xf32, #tpu.memory_space<vmem>>, vector<2x16xf32>,
    return
  }
}

</mosaic_0001>

<llo_original>
// kernel: tpu_custom_call.1
$region0: #{tpu_custom_call.1}
  #allocation0 [shape = 'u32[]', space=smem, size = 0x4, offset = 0x4, fixed_abs, tag = 'smem constant byte address 0x4 - core index']
  #allocation1 [shape = 'u32[144,128]{1,0:T(1,128)}', space=vmem, size = 0x12000, scoped, tag = 'internal scratch']
  #allocation2 [shape = 'f32[16,32]{1,0:T(8,128)}', space=vmem, size = 0x2000, scoped, tag = 'scratch operand']
  %s0 = inlined_call_operand.vmem [shape: f32[16,1], index: 0, kind: input, shape index: {}]
  %s1 = inlined_call_operand.vmem [shape: f32[1,96], index: 1, kind: input, shape index: {}]
  %s2 = inlined_call_operand.hbm [shape: f32[32,96], index: 2, kind: input, shape index: {}]
  %s3 = inlined_call_operand.hbm [shape: f32[1,96], index: 3, kind: input, shape index: {}]
  %s4 = inlined_call_operand.hbm [shape: f32[1,32], index: 4, kind: input, shape index: {}]
  %s5 = inlined_call_operand.vmem [shape: f32[2,32], index: 5, kind: input, shape index: {}]
  %s6 = inlined_call_operand.vmem [shape: f32[32,48], index: 6, kind: input, shape index: {}]
  %s7 = inlined_call_operand.hbm [shape: f32[16,48], index: 7, kind: input, shape index: {}]
  %s8 = inlined_call_operand.hbm [shape: f32[1,48], index: 8, kind: input, shape index: {}]
  %s9 = inlined_call_operand.hbm [shape: f32[1,16], index: 9, kind: input, shape index: {}]
  %s10 = inlined_call_operand.vmem [shape: f32[2,16], index: 10, kind: input, shape index: {}]
  %s11 = inlined_call_operand.vmem [shape: f32[16,16], index: 11, kind: input, shape index: {}]
  %s12 = inlined_call_operand.vmem [shape: f32[1,16], index: 12, kind: input, shape index: {}]
  %s13 = inlined_call_operand.hbm [shape: f32[2,16], index: 13, kind: output, shape index: {0}]
  %s14 = inlined_call_operand.hbm [shape: f32[2,32], index: 14, kind: output, shape index: {1}]
  %s15 = inlined_call_operand.hbm [shape: f32[2,16], index: 15, kind: output, shape index: {2}]
  %16 = xla_tuple %s13, %s14, %s15
  %s17 = sld [smem:[#allocation0]]
  $region102: #{tpu_custom_call.1} parent=0
    _
  %s19 = ssub.s32 1, %s17
  %s20 = scalar_select 0, %s19, %s17
  $region1: #{tpu_custom_call.1} parent=0
    #allocation3 [shape = 'u8[16384]{0}', space=vmem, size = 0x4000, scoped, tag = 'input window, operand 2, single buffered']
    #allocation4 [shape = 's32[1]{0}', space=sflag, size = 0x4, scoped, tag = 'scoped memory for tpu_custom_call.1']
    #allocation5 [shape = 's32[1]{0}', space=sflag, size = 0x4, scoped, tag = 'scoped memory for tpu_custom_call.1']
    #allocation6 [shape = 'u8[512]{0}', space=vmem, size = 0x400, scoped, tag = 'input window, operand 3, single buffered']
    #allocation7 [shape = 's32[1]{0}', space=sflag, size = 0x4, scoped, tag = 'scoped memory for tpu_custom_call.1']
    #allocation8 [shape = 'u8[512]{0}', space=vmem, size = 0x400, scoped, tag = 'input window, operand 4, single buffered']
    #allocation9 [shape = 'u8[8192]{0}', space=vmem, size = 0x2000, scoped, tag = 'input window, operand 7, single buffered']
    #allocation10 [shape = 's32[1]{0}', space=sflag, size = 0x4, scoped, tag = 'scoped memory for tpu_custom_call.1']
    #allocation11 [shape = 'u8[512]{0}', space=vmem, size = 0x400, scoped, tag = 'input window, operand 8, single buffered']
    #allocation12 [shape = 'u8[512]{0}', space=vmem, size = 0x400, scoped, tag = 'input window, operand 9, single buffered']
    #allocation13 [shape = 's32[1]{0}', space=sflag, size = 0x4, scoped, tag = 'scoped memory for tpu_custom_call.1']
    #allocation14 [shape = 'u8[1024]{0}', space=vmem, size = 0x400, scoped, tag = 'output window, operand 0, single buffered']
    #allocation15 [shape = 'u8[1024]{0}', space=vmem, size = 0x400, scoped, tag = 'output window, operand 1, single buffered']
    #allocation16 [shape = 's32[1]{0}', space=sflag, size = 0x4, scoped, tag = 'scoped memory for tpu_custom_call.1']
    #allocation17 [shape = 'u8[1024]{0}', space=vmem, size = 0x400, scoped, tag = 'output window, operand 2, single buffered']
    %21 = vsyncpa [#allocation4], 0
    %22 = vsyncpa [#allocation7], 0
    %23 = vsyncpa [#allocation10], 0
    %24 = vsyncpa [#allocation13], 0
    %25 = vsyncpa [#allocation5], 0
    %26 = vsyncpa [#allocation16], 0
    // Predicated region
    $region2: #{tpu_custom_call.1} parent=1 // pred_check
      _
    $region3: #{tpu_custom_call.1} parent=1 // pred_check_branch
      %28 = sbr.rel (0) target = $region5
    $region4: #{tpu_custom_call.1} parent=1 // pred_region
      _
    $region5: #{tpu_custom_call.1} parent=1 // pred_fallthru
      _
    // Predicated region
    $region6: #{tpu_custom_call.1} parent=1 // pred_check
      _
    $region7: #{tpu_custom_call.1} parent=1 // pred_check_branch
      %30 = sbr.rel (0) target = $region9
    $region8: #{tpu_custom_call.1} parent=1 // pred_region
      _
    $region9: #{tpu_custom_call.1} parent=1 // pred_fallthru
      _
    // Predicated region
    $region10: #{tpu_custom_call.1} parent=1 // pred_check
      _
    $region11: #{tpu_custom_call.1} parent=1 // pred_check_branch
      %32 = sbr.rel (0) target = $region13
    $region12: #{tpu_custom_call.1} parent=1 // pred_region
      %s34 = ssub.s32 512, 512
      %35 = vsyncadd [#allocation4], %s34
      %s36 = sshll.u32 [#allocation3], 4
      %s37 = int_to_ptr.vmem [resolvable:$true] %s36
      %42 = dma.hbm_to_vmem [thread:$0]  %s2, 512, %s37, [#allocation4], 128, 128, 8
    $region13: #{tpu_custom_call.1} parent=1 // pred_fallthru
      _
    // Predicated region
    $region14: #{tpu_custom_call.1} parent=1 // pred_check
      _
    $region15: #{tpu_custom_call.1} parent=1 // pred_check_branch
      %44 = sbr.rel (0) target = $region17
    $region16: #{tpu_custom_call.1} parent=1 // pred_region
      %s46 = ssub.s32 16, 16
      %47 = vsyncadd [#allocation7], %s46
      %s49 = sshll.u32 [#allocation6], 4
      %s50 = int_to_ptr.vmem [resolvable:$true] %s49
      %52 = dma.hbm_to_vmem [thread:$0]  %s3, 16, %s50, [#allocation7]
    $region17: #{tpu_custom_call.1} parent=1 // pred_fallthru
      _
    // Predicated region
    $region18: #{tpu_custom_call.1} parent=1 // pred_check
      _
    $region19: #{tpu_custom_call.1} parent=1 // pred_check_branch
      %54 = sbr.rel (0) target = $region21
    $region20: #{tpu_custom_call.1} parent=1 // pred_region
      %s56 = ssub.s32 16, 16
      %57 = vsyncadd [#allocation7], %s56
      %s59 = sshll.u32 [#allocation8], 4
      %s60 = int_to_ptr.vmem [resolvable:$true] %s59
      %62 = dma.hbm_to_vmem [thread:$0]  %s4, 16, %s60, [#allocation7]
    $region21: #{tpu_custom_call.1} parent=1 // pred_fallthru
      _
    // Predicated region
    $region22: #{tpu_custom_call.1} parent=1 // pred_check
      _
    $region23: #{tpu_custom_call.1} parent=1 // pred_check_branch
      %64 = sbr.rel (0) target = $region25
    $region24: #{tpu_custom_call.1} parent=1 // pred_region
      _
    $region25: #{tpu_custom_call.1} parent=1 // pred_fallthru
      _
    // Predicated region
    $region26: #{tpu_custom_call.1} parent=1 // pred_check
      _
    $region27: #{tpu_custom_call.1} parent=1 // pred_check_branch
      %66 = sbr.rel (0) target = $region29
    $region28: #{tpu_custom_call.1} parent=1 // pred_region
      _
    $region29: #{tpu_custom_call.1} parent=1 // pred_fallthru
      _
    // Predicated region
    $region30: #{tpu_custom_call.1} parent=1 // pred_check
      _
    $region31: #{tpu_custom_call.1} parent=1 // pred_check_branch
      %68 = sbr.rel (0) target = $region33
    $region32: #{tpu_custom_call.1} parent=1 // pred_region
      %s70 = ssub.s32 256, 256
      %71 = vsyncadd [#allocation10], %s70
      %s72 = sshll.u32 [#allocation9], 4
      %s73 = int_to_ptr.vmem [resolvable:$true] %s72
      %78 = dma.hbm_to_vmem [thread:$0]  %s7, 256, %s73, [#allocation10], 128, 128, 8
    $region33: #{tpu_custom_call.1} parent=1 // pred_fallthru
      _
    // Predicated region
    $region34: #{tpu_custom_call.1} parent=1 // pred_check
      _
    $region35: #{tpu_custom_call.1} parent=1 // pred_check_branch
      %80 = sbr.rel (0) target = $region37
    $region36: #{tpu_custom_call.1} parent=1 // pred_region
      %s82 = ssub.s32 16, 16
      %83 = vsyncadd [#allocation10], %s82
      %s85 = sshll.u32 [#allocation11], 4
      %s86 = int_to_ptr.vmem [resolvable:$true] %s85
      %88 = dma.hbm_to_vmem [thread:$0]  %s8, 16, %s86, [#allocation10]
    $region37: #{tpu_custom_call.1} parent=1 // pred_fallthru
      _
    // Predicated region
    $region38: #{tpu_custom_call.1} parent=1 // pred_check
      _
    $region39: #{tpu_custom_call.1} parent=1 // pred_check_branch
      %90 = sbr.rel (0) target = $region41
    $region40: #{tpu_custom_call.1} parent=1 // pred_region
      %s92 = ssub.s32 16, 16
      %93 = vsyncadd [#allocation13], %s92
      %s95 = sshll.u32 [#allocation12], 4
      %s96 = int_to_ptr.vmem [resolvable:$true] %s95
      %98 = dma.hbm_to_vmem [thread:$0]  %s9, 16, %s96, [#allocation13]
    $region41: #{tpu_custom_call.1} parent=1 // pred_fallthru
      _
    // Predicated region
    $region42: #{tpu_custom_call.1} parent=1 // pred_check
      _
    $region43: #{tpu_custom_call.1} parent=1 // pred_check_branch
      %100 = sbr.rel (0) target = $region45
    $region44: #{tpu_custom_call.1} parent=1 // pred_region
      _
    $region45: #{tpu_custom_call.1} parent=1 // pred_fallthru
      _
    // Predicated region
    $region46: #{tpu_custom_call.1} parent=1 // pred_check
      _
    $region47: #{tpu_custom_call.1} parent=1 // pred_check_branch
      %102 = sbr.rel (0) target = $region49
    $region48: #{tpu_custom_call.1} parent=1 // pred_region
      _
    $region49: #{tpu_custom_call.1} parent=1 // pred_fallthru
      _
    // Predicated region
    $region50: #{tpu_custom_call.1} parent=1 // pred_check
      _
    $region51: #{tpu_custom_call.1} parent=1 // pred_check_branch
      %104 = sbr.rel (0) target = $region53
    $region52: #{tpu_custom_call.1} parent=1 // pred_region
      _
    $region53: #{tpu_custom_call.1} parent=1 // pred_fallthru
      _
    // Predicated region
    $region54: #{tpu_custom_call.1} parent=1 // pred_check
      _
    $region55: #{tpu_custom_call.1} parent=1 // pred_check_branch
      %106 = sbr.rel (0) target = $region57
    $region56: #{tpu_custom_call.1} parent=1 // pred_region
      %107 = dma.done [#allocation4], 512
    $region57: #{tpu_custom_call.1} parent=1 // pred_fallthru
      _
    // Predicated region
    $region58: #{tpu_custom_call.1} parent=1 // pred_check
      _
    $region59: #{tpu_custom_call.1} parent=1 // pred_check_branch
      %109 = sbr.rel (0) target = $region61
    $region60: #{tpu_custom_call.1} parent=1 // pred_region
      %110 = dma.done [#allocation7], 16
    $region61: #{tpu_custom_call.1} parent=1 // pred_fallthru
      _
    // Predicated region
    $region62: #{tpu_custom_call.1} parent=1 // pred_check
      _
    $region63: #{tpu_custom_call.1} parent=1 // pred_check_branch
      %112 = sbr.rel (0) target = $region65
    $region64: #{tpu_custom_call.1} parent=1 // pred_region
      %113 = dma.done [#allocation7], 16
    $region65: #{tpu_custom_call.1} parent=1 // pred_fallthru
      _
    // Predicated region
    $region66: #{tpu_custom_call.1} parent=1 // pred_check
      _
    $region67: #{tpu_custom_call.1} parent=1 // pred_check_branch
      %115 = sbr.rel (0) target = $region69
    $region68: #{tpu_custom_call.1} parent=1 // pred_region
      %116 = dma.done [#allocation10], 256
    $region69: #{tpu_custom_call.1} parent=1 // pred_fallthru
      _
    // Predicated region
    $region70: #{tpu_custom_call.1} parent=1 // pred_check
      _
    $region71: #{tpu_custom_call.1} parent=1 // pred_check_branch
      %118 = sbr.rel (0) target = $region73
    $region72: #{tpu_custom_call.1} parent=1 // pred_region
      %119 = dma.done [#allocation10], 16
    $region73: #{tpu_custom_call.1} parent=1 // pred_fallthru
      _
    // Predicated region
    $region74: #{tpu_custom_call.1} parent=1 // pred_check
      _
    $region75: #{tpu_custom_call.1} parent=1 // pred_check_branch
      %121 = sbr.rel (0) target = $region77
    $region76: #{tpu_custom_call.1} parent=1 // pred_region
      %122 = dma.done [#allocation13], 16
    $region77: #{tpu_custom_call.1} parent=1 // pred_fallthru
      _
    %v123 = vld [vmem:[%s0] sm:$0xff]
    %v124 = vld [vmem:[%s0 + $0x8] sm:$0xff]
    %v125 = vld [vmem:[%s1] sm:$0x1]
    %127 = vset.pattern.permute.xlu0 0
    %128 = vperm.xlu0 %127, %v123
    %v129 = vpop.permute.xlu0 %128
    %132 = vset.pattern.permute.xlu0 0
    %133 = vperm.xlu0 %132, %v124
    %v134 = vpop.permute.xlu0 %133
    %v137 = vlaneseq
    %v138 = vshrl.u32 %v137, 7
    %v139 = vsub.s32 0, %v138
    %v140 = vrot.slane %v125, %v139
    %v142 = vmul.f32 %v129, %v140
    %v143 = vmul.f32 %v134, %v140
    %v144 = vld [vmem:[#allocation6] sm:$0x1]
    %v146 = vlaneseq
    %v147 = vshrl.u32 %v146, 7
    %v148 = vsub.s32 0, %v147
    %v149 = vrot.slane %v144, %v148
    %v151 = vadd.f32 %v142, %v149
    %v152 = vadd.f32 %v143, %v149
    %v153 = vld [vmem:[#allocation3] sm:$0xff]
    %v154 = vld [vmem:[#allocation3 + $0x8] sm:$0xff]
    %v155 = vld [vmem:[#allocation3 + $0x10] sm:$0xff]
    %v156 = vld [vmem:[#allocation3 + $0x18] sm:$0xff]
    %v157 = vld [vmem:[#allocation8] sm:$0x1]
    %v159 = vlaneseq
    %v160 = vshrl.u32 %v159, 7
    %v161 = vsub.s32 0, %v160
    %v162 = vrot.slane %v157, %v161
    %v163 = vld [vmem:[%s5] sm:$0x3]
    %vm164 = vcmask 261120
    %v166 = vsel %vm164, %v163, 0
    %168 = vmatprep.subr.mxu0 0.0
    %169 = vmatpush1.msra.mxu0 %v153
    %170 = vmatprep.subr.mxu0 0.0
    %171 = vmatpush1.msra.mxu0 %v154
    %172 = vmatprep.subr.mxu0 0.0
    %173 = vmatpush1.msra.mxu0 %v155
    %174 = vmatprep.subr.mxu0 0.0
    %175 = vmatpush1.msra.mxu0 %v156
    %176 = vmatprep.subr.mxu0 0.0
    %177 = vmatpush1.msra.mxu0 0.0
    %178 = vmatprep.subr.mxu0 0.0
    %179 = vmatpush1.msra.mxu0 0.0
    %180 = vmatprep.subr.mxu0 0.0
    %181 = vmatpush1.msra.mxu0 0.0
    %182 = vmatprep.subr.mxu0 0.0
    %183 = vmatpush1.msra.mxu0 0.0
    %184 = vmatprep.subr.mxu0 0.0
    %185 = vmatpush1.msra.mxu0 0.0
    %186 = vmatprep.subr.mxu0 0.0
    %187 = vmatpush1.msra.mxu0 0.0
    %188 = vmatprep.subr.mxu0 0.0
    %189 = vmatpush1.msra.mxu0 0.0
    %190 = vmatprep.subr.mxu0 0.0
    %191 = vmatpush1.msra.mxu0 0.0
    %192 = vmatprep.subr.mxu0 0.0
    %193 = vmatpush1.msra.mxu0 0.0
    %194 = vmatprep.subr.mxu0 0.0
    %195 = vmatpush1.msra.mxu0 0.0
    %196 = vmatprep.subr.mxu0 0.0
    %197 = vmatpush1.msra.mxu0 0.0
    %198 = vmatprep.subr.mxu0 0.0
    %199 = vmatpush1.msra.mxu0 0.0
    %200 = vmatprep.subr.mxu0 0.0
    %201 = vmatpush1.msra.mxu0 0.0
    %202 = vmatprep.subr.mxu0 0.0
    %203 = vmatpush1.msra.mxu0 0.0
    %204 = vmatprep.subr.mxu0 0.0
    %205 = vmatpush1.msra.mxu0 0.0
    %206 = vmatprep.subr.mxu0 0.0
    %207 = vmatpush1.msra.mxu0 0.0
    %208 = vmatprep.subr.mxu0 0.0
    %209 = vmatpush1.msra.mxu0 0.0
    %210 = vmatprep.subr.mxu0 0.0
    %211 = vmatpush1.msra.mxu0 0.0
    %212 = vmatprep.subr.mxu0 0.0
    %213 = vmatpush1.msra.mxu0 0.0
    %214 = vmatprep.subr.mxu0 0.0
    %215 = vmatpush1.msra.mxu0 0.0
    %216 = vmatprep.subr.mxu0 0.0
    %217 = vmatpush1.msra.mxu0 0.0
    %218 = vmatprep.subr.mxu0 0.0
    %219 = vmatpush1.msra.mxu0 0.0
    %220 = vmatprep.subr.mxu0 0.0
    %221 = vmatpush1.msra.mxu0 0.0
    %222 = vmatprep.subr.mxu0 0.0
    %223 = vmatpush1.msra.mxu0 0.0
    %224 = vmatprep.subr.mxu0 0.0
    %225 = vmatpush1.msra.mxu0 0.0
    %226 = vmatprep.subr.mxu0 0.0
    %227 = vmatpush1.msra.mxu0 0.0
    %228 = vmatprep.subr.mxu0 0.0
    %229 = vmatpush1.msra.mxu0 0.0
    %230 = vmatprep.subr.mxu0 0.0
    %231 = vmatpush1.msra.mxu0 0.0
    %232 = vmatprep.mubr.f32.mxu0 0.0
    %233 = vmatmul.mubr.f32.gmra.mrb[0].mxu0 %v166
    %v234 = vpop.f32.mrb[0].mxu0
    %v235 = vadd.f32 0.0, %v234
    %v236 = vpop.f32.mrb[0].mxu0
    %237 = vdwg.mxu0
    %v238 = vadd.f32 %v151, %v235
    %v239 = vxor.u32 %v238, 2147483648
    %v240 = vmul.f32 %v239, 1.442695
    %v241 = vpow.pop %v240
    %v242 = vadd.f32 %v241, 1.0
    %v243 = vrcp.pop %v242
    %v244 = vmul.f32 1.0, %v243
    %245 = vrot.lane.b32.xlu0 %v162, 64
    %v246 = vpop.permute.xlu0 %245
    %v248 = vadd.f32 %v235, %v246
    %250 = vrot.lane.b32.xlu0 %v248, 64
    %v251 = vpop.permute.xlu0 %250
    %v253 = vmul.f32 %v244, %v251
    %255 = vrot.lane.b32.xlu0 %v253, 64
    %v256 = vpop.permute.xlu0 %255
    %v258 = vadd.f32 %v151, %v256
    %v259 = vtanh.pop %v258
    %v260 = vsub.f32 1.0, %v244
    %262 = vrot.lane.b32.xlu0 %v259, 96
    %v263 = vpop.permute.xlu0 %262
    %v265 = vmul.f32 %v260, %v263
    %266 = vrot.lane.b32.xlu0 %v163, 32
    %v267 = vpop.permute.xlu0 %266
    %v269 = vmul.f32 %v244, %v267
    %v270 = vadd.f32 %v265, %v269
    %272 = vrot.lane.b32.xlu0 %v270, 96
    %v273 = vpop.permute.xlu0 %272
    %vm275 = vcmask 254976
    %276 = vst.msk [vmem:[#allocation2] sm:$0x3] %vm275, %v273
    %v277 = vsel %vm164, %v273, 0
    %279 = vmatprep.subr.mxu0 0.0
    %280 = vmatpush1.msra.mxu0 %v153
    %281 = vmatprep.subr.mxu0 0.0
    %282 = vmatpush1.msra.mxu0 %v154
    %283 = vmatprep.subr.mxu0 0.0
    %284 = vmatpush1.msra.mxu0 %v155
    %285 = vmatprep.subr.mxu0 0.0
    %286 = vmatpush1.msra.mxu0 %v156
    %287 = vmatprep.subr.mxu0 0.0
    %288 = vmatpush1.msra.mxu0 0.0
    %289 = vmatprep.subr.mxu0 0.0
    %290 = vmatpush1.msra.mxu0 0.0
    %291 = vmatprep.subr.mxu0 0.0
    %292 = vmatpush1.msra.mxu0 0.0
    %293 = vmatprep.subr.mxu0 0.0
    %294 = vmatpush1.msra.mxu0 0.0
    %295 = vmatprep.subr.mxu0 0.0
    %296 = vmatpush1.msra.mxu0 0.0
    %297 = vmatprep.subr.mxu0 0.0
    %298 = vmatpush1.msra.mxu0 0.0
    %299 = vmatprep.subr.mxu0 0.0
    %300 = vmatpush1.msra.mxu0 0.0
    %301 = vmatprep.subr.mxu0 0.0
    %302 = vmatpush1.msra.mxu0 0.0
    %303 = vmatprep.subr.mxu0 0.0
    %304 = vmatpush1.msra.mxu0 0.0
    %305 = vmatprep.subr.mxu0 0.0
    %306 = vmatpush1.msra.mxu0 0.0
    %307 = vmatprep.subr.mxu0 0.0
    %308 = vmatpush1.msra.mxu0 0.0
    %309 = vmatprep.subr.mxu0 0.0
    %310 = vmatpush1.msra.mxu0 0.0
    %311 = vmatprep.subr.mxu0 0.0
    %312 = vmatpush1.msra.mxu0 0.0
    %313 = vmatprep.subr.mxu0 0.0
    %314 = vmatpush1.msra.mxu0 0.0
    %315 = vmatprep.subr.mxu0 0.0
    %316 = vmatpush1.msra.mxu0 0.0
    %317 = vmatprep.subr.mxu0 0.0
    %318 = vmatpush1.msra.mxu0 0.0
    %319 = vmatprep.subr.mxu0 0.0
    %320 = vmatpush1.msra.mxu0 0.0
    %321 = vmatprep.subr.mxu0 0.0
    %322 = vmatpush1.msra.mxu0 0.0
    %323 = vmatprep.subr.mxu0 0.0
    %324 = vmatpush1.msra.mxu0 0.0
    %325 = vmatprep.subr.mxu0 0.0
    %326 = vmatpush1.msra.mxu0 0.0
    %327 = vmatprep.subr.mxu0 0.0
    %328 = vmatpush1.msra.mxu0 0.0
    %329 = vmatprep.subr.mxu0 0.0
    %330 = vmatpush1.msra.mxu0 0.0
    %331 = vmatprep.subr.mxu0 0.0
    %332 = vmatpush1.msra.mxu0 0.0
    %333 = vmatprep.subr.mxu0 0.0
    %334 = vmatpush1.msra.mxu0 0.0
    %335 = vmatprep.subr.mxu0 0.0
    %336 = vmatpush1.msra.mxu0 0.0
    %337 = vmatprep.subr.mxu0 0.0
    %338 = vmatpush1.msra.mxu0 0.0
    %339 = vmatprep.subr.mxu0 0.0
    %340 = vmatpush1.msra.mxu0 0.0
    %341 = vmatprep.subr.mxu0 0.0
    %342 = vmatpush1.msra.mxu0 0.0
    %343 = vmatprep.mubr.f32.mxu0 0.0
    %344 = vmatmul.mubr.f32.gmra.mrb[0].mxu0 %v277
    %v345 = vpop.f32.mrb[0].mxu0
    %v346 = vadd.f32 0.0, %v345
    %v347 = vpop.f32.mrb[0].mxu0
    %348 = vdwg.mxu0
    %v350 = vrot.slane %v346, 6
    %v352 = vadd.f32 %v151, %v350
    %v353 = vxor.u32 %v352, 2147483648
    %v354 = vmul.f32 %v353, 1.442695
    %v355 = vpow.pop %v354
    %v356 = vadd.f32 %v355, 1.0
    %v357 = vrcp.pop %v356
    %v358 = vmul.f32 1.0, %v357
    %v359 = vadd.f32 %v346, %v246
    %v361 = vrot.slane %v359, 6
    %362 = vrot.lane.b32.xlu0 %v361, 64
    %v363 = vpop.permute.xlu0 %362
    %v365 = vmul.f32 %v358, %v363
    %367 = vrot.lane.b32.xlu0 %v365, 64
    %v368 = vpop.permute.xlu0 %367
    %v370 = vadd.f32 %v151, %v368
    %v371 = vtanh.pop %v370
    %v372 = vsub.f32 1.0, %v358
    %374 = vrot.lane.b32.xlu0 %v371, 96
    %v375 = vpop.permute.xlu0 %374
    %v377 = vmul.f32 %v372, %v375
    %v378 = vrot.slane %v270, 6
    %v380 = vmul.f32 %v358, %v378
    %v381 = vadd.f32 %v377, %v380
    %383 = vrot.lane.b32.xlu0 %v381, 96
    %v384 = vpop.permute.xlu0 %383
    %vm386 = vcmask 257026
    %387 = vst.msk [vmem:[#allocation2] sm:$0xc] %vm386, %v384
    %v388 = vrot.slane %v381, 2
    %389 = vrot.lane.b32.xlu0 %v388, 96
    %v390 = vpop.permute.xlu0 %389
    %v391 = vsel %vm164, %v390, 0
    %393 = vmatprep.subr.mxu0 0.0
    %394 = vmatpush1.msra.mxu0 %v153
    %395 = vmatprep.subr.mxu0 0.0
    %396 = vmatpush1.msra.mxu0 %v154
    %397 = vmatprep.subr.mxu0 0.0
    %398 = vmatpush1.msra.mxu0 %v155
    %399 = vmatprep.subr.mxu0 0.0
    %400 = vmatpush1.msra.mxu0 %v156
    %401 = vmatprep.subr.mxu0 0.0
    %402 = vmatpush1.msra.mxu0 0.0
    %403 = vmatprep.subr.mxu0 0.0
    %404 = vmatpush1.msra.mxu0 0.0
    %405 = vmatprep.subr.mxu0 0.0
    %406 = vmatpush1.msra.mxu0 0.0
    %407 = vmatprep.subr.mxu0 0.0
    %408 = vmatpush1.msra.mxu0 0.0
    %409 = vmatprep.subr.mxu0 0.0
    %410 = vmatpush1.msra.mxu0 0.0
    %411 = vmatprep.subr.mxu0 0.0
    %412 = vmatpush1.msra.mxu0 0.0
    %413 = vmatprep.subr.mxu0 0.0
    %414 = vmatpush1.msra.mxu0 0.0
    %415 = vmatprep.subr.mxu0 0.0
    %416 = vmatpush1.msra.mxu0 0.0
    %417 = vmatprep.subr.mxu0 0.0
    %418 = vmatpush1.msra.mxu0 0.0
    %419 = vmatprep.subr.mxu0 0.0
    %420 = vmatpush1.msra.mxu0 0.0
    %421 = vmatprep.subr.mxu0 0.0
    %422 = vmatpush1.msra.mxu0 0.0
    %423 = vmatprep.subr.mxu0 0.0
    %424 = vmatpush1.msra.mxu0 0.0
    %425 = vmatprep.subr.mxu0 0.0
    %426 = vmatpush1.msra.mxu0 0.0
    %427 = vmatprep.subr.mxu0 0.0
    %428 = vmatpush1.msra.mxu0 0.0
    %429 = vmatprep.subr.mxu0 0.0
    %430 = vmatpush1.msra.mxu0 0.0
    %431 = vmatprep.subr.mxu0 0.0
    %432 = vmatpush1.msra.mxu0 0.0
    %433 = vmatprep.subr.mxu0 0.0
    %434 = vmatpush1.msra.mxu0 0.0
    %435 = vmatprep.subr.mxu0 0.0
    %436 = vmatpush1.msra.mxu0 0.0
    %437 = vmatprep.subr.mxu0 0.0
    %438 = vmatpush1.msra.mxu0 0.0
    %439 = vmatprep.subr.mxu0 0.0
    %440 = vmatpush1.msra.mxu0 0.0
    %441 = vmatprep.subr.mxu0 0.0
    %442 = vmatpush1.msra.mxu0 0.0
    %443 = vmatprep.subr.mxu0 0.0
    %444 = vmatpush1.msra.mxu0 0.0
    %445 = vmatprep.subr.mxu0 0.0
    %446 = vmatpush1.msra.mxu0 0.0
    %447 = vmatprep.subr.mxu0 0.0
    %448 = vmatpush1.msra.mxu0 0.0
    %449 = vmatprep.subr.mxu0 0.0
    %450 = vmatpush1.msra.mxu0 0.0
    %451 = vmatprep.subr.mxu0 0.0
    %452 = vmatpush1.msra.mxu0 0.0
    %453 = vmatprep.subr.mxu0 0.0
    %454 = vmatpush1.msra.mxu0 0.0
    %455 = vmatprep.subr.mxu0 0.0
    %456 = vmatpush1.msra.mxu0 0.0
    %457 = vmatprep.mubr.f32.mxu0 0.0
    %458 = vmatmul.mubr.f32.gmra.mrb[0].mxu0 %v391
    %v459 = vpop.f32.mrb[0].mxu0
    %v460 = vadd.f32 0.0, %v459
    %v461 = vpop.f32.mrb[0].mxu0
    %462 = vdwg.mxu0
    %v464 = vrot.slane %v460, 4
    %v466 = vadd.f32 %v151, %v464
    %v467 = vxor.u32 %v466, 2147483648
    %v468 = vmul.f32 %v467, 1.442695
    %v469 = vpow.pop %v468
    %v470 = vadd.f32 %v469, 1.0
    %v471 = vrcp.pop %v470
    %v472 = vmul.f32 1.0, %v471
    %v473 = vadd.f32 %v460, %v246
    %v475 = vrot.slane %v473, 4
    %476 = vrot.lane.b32.xlu0 %v475, 64
    %v477 = vpop.permute.xlu0 %476
    %v479 = vmul.f32 %v472, %v477
    %481 = vrot.lane.b32.xlu0 %v479, 64
    %v482 = vpop.permute.xlu0 %481
    %v484 = vadd.f32 %v151, %v482
    %v485 = vtanh.pop %v484
    %v486 = vsub.f32 1.0, %v472
    %488 = vrot.lane.b32.xlu0 %v485, 96
    %v489 = vpop.permute.xlu0 %488
    %v491 = vmul.f32 %v486, %v489
    %v492 = vrot.slane %v381, 6
    %v494 = vmul.f32 %v472, %v492
    %v495 = vadd.f32 %v491, %v494
    %497 = vrot.lane.b32.xlu0 %v495, 96
    %v498 = vpop.permute.xlu0 %497
    %vm500 = vcmask 259076
    %501 = vst.msk [vmem:[#allocation2] sm:$0x30] %vm500, %v498
    %v502 = vrot.slane %v495, 4
    %503 = vrot.lane.b32.xlu0 %v502, 96
    %v504 = vpop.permute.xlu0 %503
    %v505 = vsel %vm164, %v504, 0
    %507 = vmatprep.subr.mxu0 0.0
    %508 = vmatpush1.msra.mxu0 %v153
    %509 = vmatprep.subr.mxu0 0.0
    %510 = vmatpush1.msra.mxu0 %v154
    %511 = vmatprep.subr.mxu0 0.0
    %512 = vmatpush1.msra.mxu0 %v155
    %513 = vmatprep.subr.mxu0 0.0
    %514 = vmatpush1.msra.mxu0 %v156
    %515 = vmatprep.subr.mxu0 0.0
    %516 = vmatpush1.msra.mxu0 0.0
    %517 = vmatprep.subr.mxu0 0.0
    %518 = vmatpush1.msra.mxu0 0.0
    %519 = vmatprep.subr.mxu0 0.0
    %520 = vmatpush1.msra.mxu0 0.0
    %521 = vmatprep.subr.mxu0 0.0
    %522 = vmatpush1.msra.mxu0 0.0
    %523 = vmatprep.subr.mxu0 0.0
    %524 = vmatpush1.msra.mxu0 0.0
    %525 = vmatprep.subr.mxu0 0.0
    %526 = vmatpush1.msra.mxu0 0.0
    %527 = vmatprep.subr.mxu0 0.0
    %528 = vmatpush1.msra.mxu0 0.0
    %529 = vmatprep.subr.mxu0 0.0
    %530 = vmatpush1.msra.mxu0 0.0
    %531 = vmatprep.subr.mxu0 0.0
    %532 = vmatpush1.msra.mxu0 0.0
    %533 = vmatprep.subr.mxu0 0.0
    %534 = vmatpush1.msra.mxu0 0.0
    %535 = vmatprep.subr.mxu0 0.0
    %536 = vmatpush1.msra.mxu0 0.0
    %537 = vmatprep.subr.mxu0 0.0
    %538 = vmatpush1.msra.mxu0 0.0
    %539 = vmatprep.subr.mxu0 0.0
    %540 = vmatpush1.msra.mxu0 0.0
    %541 = vmatprep.subr.mxu0 0.0
    %542 = vmatpush1.msra.mxu0 0.0
    %543 = vmatprep.subr.mxu0 0.0
    %544 = vmatpush1.msra.mxu0 0.0
    %545 = vmatprep.subr.mxu0 0.0
    %546 = vmatpush1.msra.mxu0 0.0
    %547 = vmatprep.subr.mxu0 0.0
    %548 = vmatpush1.msra.mxu0 0.0
    %549 = vmatprep.subr.mxu0 0.0
    %550 = vmatpush1.msra.mxu0 0.0
    %551 = vmatprep.subr.mxu0 0.0
    %552 = vmatpush1.msra.mxu0 0.0
    %553 = vmatprep.subr.mxu0 0.0
    %554 = vmatpush1.msra.mxu0 0.0
    %555 = vmatprep.subr.mxu0 0.0
    %556 = vmatpush1.msra.mxu0 0.0
    %557 = vmatprep.subr.mxu0 0.0
    %558 = vmatpush1.msra.mxu0 0.0
    %559 = vmatprep.subr.mxu0 0.0
    %560 = vmatpush1.msra.mxu0 0.0
    %561 = vmatprep.subr.mxu0 0.0
    %562 = vmatpush1.msra.mxu0 0.0
    %563 = vmatprep.subr.mxu0 0.0
    %564 = vmatpush1.msra.mxu0 0.0
    %565 = vmatprep.subr.mxu0 0.0
    %566 = vmatpush1.msra.mxu0 0.0
    %567 = vmatprep.subr.mxu0 0.0
    %568 = vmatpush1.msra.mxu0 0.0
    %569 = vmatprep.subr.mxu0 0.0
    %570 = vmatpush1.msra.mxu0 0.0
    %571 = vmatprep.mubr.f32.mxu0 0.0
    %572 = vmatmul.mubr.f32.gmra.mrb[0].mxu0 %v505
    %v573 = vpop.f32.mrb[0].mxu0
    %v574 = vadd.f32 0.0, %v573
    %v575 = vpop.f32.mrb[0].mxu0
    %576 = vdwg.mxu0
    %v578 = vrot.slane %v574, 2
    %v580 = vadd.f32 %v151, %v578
    %v581 = vxor.u32 %v580, 2147483648
    %v582 = vmul.f32 %v581, 1.442695
    %v583 = vpow.pop %v582
    %v584 = vadd.f32 %v583, 1.0
    %v585 = vrcp.pop %v584
    %v586 = vmul.f32 1.0, %v585
    %v587 = vadd.f32 %v574, %v246
    %v589 = vrot.slane %v587, 2
    %590 = vrot.lane.b32.xlu0 %v589, 64
    %v591 = vpop.permute.xlu0 %590
    %v593 = vmul.f32 %v586, %v591
    %595 = vrot.lane.b32.xlu0 %v593, 64
    %v596 = vpop.permute.xlu0 %595
    %v598 = vadd.f32 %v151, %v596
    %v599 = vtanh.pop %v598
    %v600 = vsub.f32 1.0, %v586
    %602 = vrot.lane.b32.xlu0 %v599, 96
    %v603 = vpop.permute.xlu0 %602
    %v605 = vmul.f32 %v600, %v603
    %v606 = vrot.slane %v495, 6
    %v608 = vmul.f32 %v586, %v606
    %v609 = vadd.f32 %v605, %v608
    %611 = vrot.lane.b32.xlu0 %v609, 96
    %v612 = vpop.permute.xlu0 %611
    %vm614 = vcmask 261126
    %615 = vst.msk [vmem:[#allocation2] sm:$0xc0] %vm614, %v612
    %v616 = vrot.slane %v609, 6
    %617 = vrot.lane.b32.xlu0 %v616, 96
    %v618 = vpop.permute.xlu0 %617
    %v619 = vsel %vm164, %v618, 0
    %621 = vmatprep.subr.mxu0 0.0
    %622 = vmatpush1.msra.mxu0 %v153
    %623 = vmatprep.subr.mxu0 0.0
    %624 = vmatpush1.msra.mxu0 %v154
    %625 = vmatprep.subr.mxu0 0.0
    %626 = vmatpush1.msra.mxu0 %v155
    %627 = vmatprep.subr.mxu0 0.0
    %628 = vmatpush1.msra.mxu0 %v156
    %629 = vmatprep.subr.mxu0 0.0
    %630 = vmatpush1.msra.mxu0 0.0
    %631 = vmatprep.subr.mxu0 0.0
    %632 = vmatpush1.msra.mxu0 0.0
    %633 = vmatprep.subr.mxu0 0.0
    %634 = vmatpush1.msra.mxu0 0.0
    %635 = vmatprep.subr.mxu0 0.0
    %636 = vmatpush1.msra.mxu0 0.0
    %637 = vmatprep.subr.mxu0 0.0
    %638 = vmatpush1.msra.mxu0 0.0
    %639 = vmatprep.subr.mxu0 0.0
    %640 = vmatpush1.msra.mxu0 0.0
    %641 = vmatprep.subr.mxu0 0.0
    %642 = vmatpush1.msra.mxu0 0.0
    %643 = vmatprep.subr.mxu0 0.0
    %644 = vmatpush1.msra.mxu0 0.0
    %645 = vmatprep.subr.mxu0 0.0
    %646 = vmatpush1.msra.mxu0 0.0
    %647 = vmatprep.subr.mxu0 0.0
    %648 = vmatpush1.msra.mxu0 0.0
    %649 = vmatprep.subr.mxu0 0.0
    %650 = vmatpush1.msra.mxu0 0.0
    %651 = vmatprep.subr.mxu0 0.0
    %652 = vmatpush1.msra.mxu0 0.0
    %653 = vmatprep.subr.mxu0 0.0
    %654 = vmatpush1.msra.mxu0 0.0
    %655 = vmatprep.subr.mxu0 0.0
    %656 = vmatpush1.msra.mxu0 0.0
    %657 = vmatprep.subr.mxu0 0.0
    %658 = vmatpush1.msra.mxu0 0.0
    %659 = vmatprep.subr.mxu0 0.0
    %660 = vmatpush1.msra.mxu0 0.0
    %661 = vmatprep.subr.mxu0 0.0
    %662 = vmatpush1.msra.mxu0 0.0
    %663 = vmatprep.subr.mxu0 0.0
    %664 = vmatpush1.msra.mxu0 0.0
    %665 = vmatprep.subr.mxu0 0.0
    %666 = vmatpush1.msra.mxu0 0.0
    %667 = vmatprep.subr.mxu0 0.0
    %668 = vmatpush1.msra.mxu0 0.0
    %669 = vmatprep.subr.mxu0 0.0
    %670 = vmatpush1.msra.mxu0 0.0
    %671 = vmatprep.subr.mxu0 0.0
    %672 = vmatpush1.msra.mxu0 0.0
    %673 = vmatprep.subr.mxu0 0.0
    %674 = vmatpush1.msra.mxu0 0.0
    %675 = vmatprep.subr.mxu0 0.0
    %676 = vmatpush1.msra.mxu0 0.0
    %677 = vmatprep.subr.mxu0 0.0
    %678 = vmatpush1.msra.mxu0 0.0
    %679 = vmatprep.subr.mxu0 0.0
    %680 = vmatpush1.msra.mxu0 0.0
    %681 = vmatprep.subr.mxu0 0.0
    %682 = vmatpush1.msra.mxu0 0.0
    %683 = vmatprep.subr.mxu0 0.0
    %684 = vmatpush1.msra.mxu0 0.0
    %685 = vmatprep.mubr.f32.mxu0 0.0
    %686 = vmatmul.mubr.f32.gmra.mrb[0].mxu0 %v619
    %v687 = vpop.f32.mrb[0].mxu0
    %v688 = vadd.f32 0.0, %v687
    %v689 = vpop.f32.mrb[0].mxu0
    %690 = vdwg.mxu0
    %v691 = vadd.f32 %v152, %v688
    %v692 = vxor.u32 %v691, 2147483648
    %v693 = vmul.f32 %v692, 1.442695
    %v694 = vpow.pop %v693
    %v695 = vadd.f32 %v694, 1.0
    %v696 = vrcp.pop %v695
    %v697 = vmul.f32 1.0, %v696
    %v698 = vadd.f32 %v688, %v246
    %700 = vrot.lane.b32.xlu0 %v698, 64
    %v701 = vpop.permute.xlu0 %700
    %v703 = vmul.f32 %v697, %v701
    %705 = vrot.lane.b32.xlu0 %v703, 64
    %v706 = vpop.permute.xlu0 %705
    %v708 = vadd.f32 %v152, %v706
    %v709 = vtanh.pop %v708
    %v710 = vsub.f32 1.0, %v697
    %712 = vrot.lane.b32.xlu0 %v709, 96
    %v713 = vpop.permute.xlu0 %712
    %v715 = vmul.f32 %v710, %v713
    %v717 = vmul.f32 %v697, %v616
    %v718 = vadd.f32 %v715, %v717
    %720 = vrot.lane.b32.xlu0 %v718, 96
    %v721 = vpop.permute.xlu0 %720
    %723 = vst.msk [vmem:[#allocation2 + $0x8] sm:$0x3] %vm275, %v721
    %v724 = vsel %vm164, %v721, 0
    %726 = vmatprep.subr.mxu0 0.0
    %727 = vmatpush1.msra.mxu0 %v153
    %728 = vmatprep.subr.mxu0 0.0
    %729 = vmatpush1.msra.mxu0 %v154
    %730 = vmatprep.subr.mxu0 0.0
    %731 = vmatpush1.msra.mxu0 %v155
    %732 = vmatprep.subr.mxu0 0.0
    %733 = vmatpush1.msra.mxu0 %v156
    %734 = vmatprep.subr.mxu0 0.0
    %735 = vmatpush1.msra.mxu0 0.0
    %736 = vmatprep.subr.mxu0 0.0
    %737 = vmatpush1.msra.mxu0 0.0
    %738 = vmatprep.subr.mxu0 0.0
    %739 = vmatpush1.msra.mxu0 0.0
    %740 = vmatprep.subr.mxu0 0.0
    %741 = vmatpush1.msra.mxu0 0.0
    %742 = vmatprep.subr.mxu0 0.0
    %743 = vmatpush1.msra.mxu0 0.0
    %744 = vmatprep.subr.mxu0 0.0
    %745 = vmatpush1.msra.mxu0 0.0
    %746 = vmatprep.subr.mxu0 0.0
    %747 = vmatpush1.msra.mxu0 0.0
    %748 = vmatprep.subr.mxu0 0.0
    %749 = vmatpush1.msra.mxu0 0.0
    %750 = vmatprep.subr.mxu0 0.0
    %751 = vmatpush1.msra.mxu0 0.0
    %752 = vmatprep.subr.mxu0 0.0
    %753 = vmatpush1.msra.mxu0 0.0
    %754 = vmatprep.subr.mxu0 0.0
    %755 = vmatpush1.msra.mxu0 0.0
    %756 = vmatprep.subr.mxu0 0.0
    %757 = vmatpush1.msra.mxu0 0.0
    %758 = vmatprep.subr.mxu0 0.0
    %759 = vmatpush1.msra.mxu0 0.0
    %760 = vmatprep.subr.mxu0 0.0
    %761 = vmatpush1.msra.mxu0 0.0
    %762 = vmatprep.subr.mxu0 0.0
    %763 = vmatpush1.msra.mxu0 0.0
    %764 = vmatprep.subr.mxu0 0.0
    %765 = vmatpush1.msra.mxu0 0.0
    %766 = vmatprep.subr.mxu0 0.0
    %767 = vmatpush1.msra.mxu0 0.0
    %768 = vmatprep.subr.mxu0 0.0
    %769 = vmatpush1.msra.mxu0 0.0
    %770 = vmatprep.subr.mxu0 0.0
    %771 = vmatpush1.msra.mxu0 0.0
    %772 = vmatprep.subr.mxu0 0.0
    %773 = vmatpush1.msra.mxu0 0.0
    %774 = vmatprep.subr.mxu0 0.0
    %775 = vmatpush1.msra.mxu0 0.0
    %776 = vmatprep.subr.mxu0 0.0
    %777 = vmatpush1.msra.mxu0 0.0
    %778 = vmatprep.subr.mxu0 0.0
    %779 = vmatpush1.msra.mxu0 0.0
    %780 = vmatprep.subr.mxu0 0.0
    %781 = vmatpush1.msra.mxu0 0.0
    %782 = vmatprep.subr.mxu0 0.0
    %783 = vmatpush1.msra.mxu0 0.0
    %784 = vmatprep.subr.mxu0 0.0
    %785 = vmatpush1.msra.mxu0 0.0
    %786 = vmatprep.subr.mxu0 0.0
    %787 = vmatpush1.msra.mxu0 0.0
    %788 = vmatprep.subr.mxu0 0.0
    %789 = vmatpush1.msra.mxu0 0.0
    %790 = vmatprep.mubr.f32.mxu0 0.0
    %791 = vmatmul.mubr.f32.gmra.mrb[0].mxu0 %v724
    %v792 = vpop.f32.mrb[0].mxu0
    %v793 = vadd.f32 0.0, %v792
    %v794 = vpop.f32.mrb[0].mxu0
    %795 = vdwg.mxu0
    %v797 = vrot.slane %v793, 6
    %v799 = vadd.f32 %v152, %v797
    %v800 = vxor.u32 %v799, 2147483648
    %v801 = vmul.f32 %v800, 1.442695
    %v802 = vpow.pop %v801
    %v803 = vadd.f32 %v802, 1.0
    %v804 = vrcp.pop %v803
    %v805 = vmul.f32 1.0, %v804
    %v806 = vadd.f32 %v793, %v246
    %v808 = vrot.slane %v806, 6
    %809 = vrot.lane.b32.xlu0 %v808, 64
    %v810 = vpop.permute.xlu0 %809
    %v812 = vmul.f32 %v805, %v810
    %814 = vrot.lane.b32.xlu0 %v812, 64
    %v815 = vpop.permute.xlu0 %814
    %v817 = vadd.f32 %v152, %v815
    %v818 = vtanh.pop %v817
    %v819 = vsub.f32 1.0, %v805
    %821 = vrot.lane.b32.xlu0 %v818, 96
    %v822 = vpop.permute.xlu0 %821
    %v824 = vmul.f32 %v819, %v822
    %v825 = vrot.slane %v718, 6
    %v827 = vmul.f32 %v805, %v825
    %v828 = vadd.f32 %v824, %v827
    %830 = vrot.lane.b32.xlu0 %v828, 96
    %v831 = vpop.permute.xlu0 %830
    %833 = vst.msk [vmem:[#allocation2 + $0x8] sm:$0xc] %vm386, %v831
    %v834 = vrot.slane %v828, 2
    %835 = vrot.lane.b32.xlu0 %v834, 96
    %v836 = vpop.permute.xlu0 %835
    %v837 = vsel %vm164, %v836, 0
    %839 = vmatprep.subr.mxu0 0.0
    %840 = vmatpush1.msra.mxu0 %v153
    %841 = vmatprep.subr.mxu0 0.0
    %842 = vmatpush1.msra.mxu0 %v154
    %843 = vmatprep.subr.mxu0 0.0
    %844 = vmatpush1.msra.mxu0 %v155
    %845 = vmatprep.subr.mxu0 0.0
    %846 = vmatpush1.msra.mxu0 %v156
    %847 = vmatprep.subr.mxu0 0.0
    %848 = vmatpush1.msra.mxu0 0.0
    %849 = vmatprep.subr.mxu0 0.0
    %850 = vmatpush1.msra.mxu0 0.0
    %851 = vmatprep.subr.mxu0 0.0
    %852 = vmatpush1.msra.mxu0 0.0
    %853 = vmatprep.subr.mxu0 0.0
    %854 = vmatpush1.msra.mxu0 0.0
    %855 = vmatprep.subr.mxu0 0.0
    %856 = vmatpush1.msra.mxu0 0.0
    %857 = vmatprep.subr.mxu0 0.0
    %858 = vmatpush1.msra.mxu0 0.0
    %859 = vmatprep.subr.mxu0 0.0
    %860 = vmatpush1.msra.mxu0 0.0
    %861 = vmatprep.subr.mxu0 0.0
    %862 = vmatpush1.msra.mxu0 0.0
    %863 = vmatprep.subr.mxu0 0.0
    %864 = vmatpush1.msra.mxu0 0.0
    %865 = vmatprep.subr.mxu0 0.0
    %866 = vmatpush1.msra.mxu0 0.0
    %867 = vmatprep.subr.mxu0 0.0
    %868 = vmatpush1.msra.mxu0 0.0
    %869 = vmatprep.subr.mxu0 0.0
    %870 = vmatpush1.msra.mxu0 0.0
    %871 = vmatprep.subr.mxu0 0.0
    %872 = vmatpush1.msra.mxu0 0.0
    %873 = vmatprep.subr.mxu0 0.0
    %874 = vmatpush1.msra.mxu0 0.0
    %875 = vmatprep.subr.mxu0 0.0
    %876 = vmatpush1.msra.mxu0 0.0
    %877 = vmatprep.subr.mxu0 0.0
    %878 = vmatpush1.msra.mxu0 0.0
    %879 = vmatprep.subr.mxu0 0.0
    %880 = vmatpush1.msra.mxu0 0.0
    %881 = vmatprep.subr.mxu0 0.0
    %882 = vmatpush1.msra.mxu0 0.0
    %883 = vmatprep.subr.mxu0 0.0
    %884 = vmatpush1.msra.mxu0 0.0
    %885 = vmatprep.subr.mxu0 0.0
    %886 = vmatpush1.msra.mxu0 0.0
    %887 = vmatprep.subr.mxu0 0.0
    %888 = vmatpush1.msra.mxu0 0.0
    %889 = vmatprep.subr.mxu0 0.0
    %890 = vmatpush1.msra.mxu0 0.0
    %891 = vmatprep.subr.mxu0 0.0
    %892 = vmatpush1.msra.mxu0 0.0
    %893 = vmatprep.subr.mxu0 0.0
    %894 = vmatpush1.msra.mxu0 0.0
    %895 = vmatprep.subr.mxu0 0.0
    %896 = vmatpush1.msra.mxu0 0.0
    %897 = vmatprep.subr.mxu0 0.0
    %898 = vmatpush1.msra.mxu0 0.0
    %899 = vmatprep.subr.mxu0 0.0
    %900 = vmatpush1.msra.mxu0 0.0
    %901 = vmatprep.subr.mxu0 0.0
    %902 = vmatpush1.msra.mxu0 0.0
    %903 = vmatprep.mubr.f32.mxu0 0.0
    %904 = vmatmul.mubr.f32.gmra.mrb[0].mxu0 %v837
    %v905 = vpop.f32.mrb[0].mxu0
    %v906 = vadd.f32 0.0, %v905
    %v907 = vpop.f32.mrb[0].mxu0
    %908 = vdwg.mxu0
    %v910 = vrot.slane %v906, 4
    %v912 = vadd.f32 %v152, %v910
    %v913 = vxor.u32 %v912, 2147483648
    %v914 = vmul.f32 %v913, 1.442695
    %v915 = vpow.pop %v914
    %v916 = vadd.f32 %v915, 1.0
    %v917 = vrcp.pop %v916
    %v918 = vmul.f32 1.0, %v917
    %v919 = vadd.f32 %v906, %v246
    %v921 = vrot.slane %v919, 4
    %922 = vrot.lane.b32.xlu0 %v921, 64
    %v923 = vpop.permute.xlu0 %922
    %v925 = vmul.f32 %v918, %v923
    %927 = vrot.lane.b32.xlu0 %v925, 64
    %v928 = vpop.permute.xlu0 %927
    %v930 = vadd.f32 %v152, %v928
    %v931 = vtanh.pop %v930
    %v932 = vsub.f32 1.0, %v918
    %934 = vrot.lane.b32.xlu0 %v931, 96
    %v935 = vpop.permute.xlu0 %934
    %v937 = vmul.f32 %v932, %v935
    %v938 = vrot.slane %v828, 6
    %v940 = vmul.f32 %v918, %v938
    %v941 = vadd.f32 %v937, %v940
    %943 = vrot.lane.b32.xlu0 %v941, 96
    %v944 = vpop.permute.xlu0 %943
    %946 = vst.msk [vmem:[#allocation2 + $0x8] sm:$0x30] %vm500, %v944
    %v947 = vrot.slane %v941, 4
    %948 = vrot.lane.b32.xlu0 %v947, 96
    %v949 = vpop.permute.xlu0 %948
    %v950 = vsel %vm164, %v949, 0
    %952 = vmatprep.subr.mxu0 0.0
    %953 = vmatpush1.msra.mxu0 %v153
    %954 = vmatprep.subr.mxu0 0.0
    %955 = vmatpush1.msra.mxu0 %v154
    %956 = vmatprep.subr.mxu0 0.0
    %957 = vmatpush1.msra.mxu0 %v155
    %958 = vmatprep.subr.mxu0 0.0
    %959 = vmatpush1.msra.mxu0 %v156
    %960 = vmatprep.subr.mxu0 0.0
    %961 = vmatpush1.msra.mxu0 0.0
    %962 = vmatprep.subr.mxu0 0.0
    %963 = vmatpush1.msra.mxu0 0.0
    %964 = vmatprep.subr.mxu0 0.0
    %965 = vmatpush1.msra.mxu0 0.0
    %966 = vmatprep.subr.mxu0 0.0
    %967 = vmatpush1.msra.mxu0 0.0
    %968 = vmatprep.subr.mxu0 0.0
    %969 = vmatpush1.msra.mxu0 0.0
    %970 = vmatprep.subr.mxu0 0.0
    %971 = vmatpush1.msra.mxu0 0.0
    %972 = vmatprep.subr.mxu0 0.0
    %973 = vmatpush1.msra.mxu0 0.0
    %974 = vmatprep.subr.mxu0 0.0
    %975 = vmatpush1.msra.mxu0 0.0
    %976 = vmatprep.subr.mxu0 0.0
    %977 = vmatpush1.msra.mxu0 0.0
    %978 = vmatprep.subr.mxu0 0.0
    %979 = vmatpush1.msra.mxu0 0.0
    %980 = vmatprep.subr.mxu0 0.0
    %981 = vmatpush1.msra.mxu0 0.0
    %982 = vmatprep.subr.mxu0 0.0
    %983 = vmatpush1.msra.mxu0 0.0
    %984 = vmatprep.subr.mxu0 0.0
    %985 = vmatpush1.msra.mxu0 0.0
    %986 = vmatprep.subr.mxu0 0.0
    %987 = vmatpush1.msra.mxu0 0.0
    %988 = vmatprep.subr.mxu0 0.0
    %989 = vmatpush1.msra.mxu0 0.0
    %990 = vmatprep.subr.mxu0 0.0
    %991 = vmatpush1.msra.mxu0 0.0
    %992 = vmatprep.subr.mxu0 0.0
    %993 = vmatpush1.msra.mxu0 0.0
    %994 = vmatprep.subr.mxu0 0.0
    %995 = vmatpush1.msra.mxu0 0.0
    %996 = vmatprep.subr.mxu0 0.0
    %997 = vmatpush1.msra.mxu0 0.0
    %998 = vmatprep.subr.mxu0 0.0
    %999 = vmatpush1.msra.mxu0 0.0
    %1000 = vmatprep.subr.mxu0 0.0
    %1001 = vmatpush1.msra.mxu0 0.0
    %1002 = vmatprep.subr.mxu0 0.0
    %1003 = vmatpush1.msra.mxu0 0.0
    %1004 = vmatprep.subr.mxu0 0.0
    %1005 = vmatpush1.msra.mxu0 0.0
    %1006 = vmatprep.subr.mxu0 0.0
    %1007 = vmatpush1.msra.mxu0 0.0
    %1008 = vmatprep.subr.mxu0 0.0
    %1009 = vmatpush1.msra.mxu0 0.0
    %1010 = vmatprep.subr.mxu0 0.0
    %1011 = vmatpush1.msra.mxu0 0.0
    %1012 = vmatprep.subr.mxu0 0.0
    %1013 = vmatpush1.msra.mxu0 0.0
    %1014 = vmatprep.subr.mxu0 0.0
    %1015 = vmatpush1.msra.mxu0 0.0
    %1016 = vmatprep.mubr.f32.mxu0 0.0
    %1017 = vmatmul.mubr.f32.gmra.mrb[0].mxu0 %v950
    %v1018 = vpop.f32.mrb[0].mxu0
    %v1019 = vadd.f32 0.0, %v1018
    %v1020 = vpop.f32.mrb[0].mxu0
    %1021 = vdwg.mxu0
    %v1023 = vrot.slane %v1019, 2
    %v1025 = vadd.f32 %v152, %v1023
    %v1026 = vxor.u32 %v1025, 2147483648
    %v1027 = vmul.f32 %v1026, 1.442695
    %v1028 = vpow.pop %v1027
    %v1029 = vadd.f32 %v1028, 1.0
    %v1030 = vrcp.pop %v1029
    %v1031 = vmul.f32 1.0, %v1030
    %v1032 = vadd.f32 %v1019, %v246
    %v1034 = vrot.slane %v1032, 2
    %1035 = vrot.lane.b32.xlu0 %v1034, 64
    %v1036 = vpop.permute.xlu0 %1035
    %v1038 = vmul.f32 %v1031, %v1036
    %1040 = vrot.lane.b32.xlu0 %v1038, 64
    %v1041 = vpop.permute.xlu0 %1040
    %v1043 = vadd.f32 %v152, %v1041
    %v1044 = vtanh.pop %v1043
    %v1045 = vsub.f32 1.0, %v1031
    %1047 = vrot.lane.b32.xlu0 %v1044, 96
    %v1048 = vpop.permute.xlu0 %1047
    %v1050 = vmul.f32 %v1045, %v1048
    %v1051 = vrot.slane %v941, 6
    %v1053 = vmul.f32 %v1031, %v1051
    %v1054 = vadd.f32 %v1050, %v1053
    %1056 = vrot.lane.b32.xlu0 %v1054, 96
    %v1057 = vpop.permute.xlu0 %1056
    %1059 = vst.msk [vmem:[#allocation2 + $0x8] sm:$0xc0] %vm614, %v1057
    %1060 = vst.msk [vmem:[#allocation15 - $0x6] sm:$0xc0] %vm614, %v1057
    %v1061 = vld [vmem:[#allocation2] sm:$0xff]
    %v1062 = vld [vmem:[#allocation2 + $0x8] sm:$0xff]
    %v1063 = vld [vmem:[%s6] sm:$0xff]
    %v1064 = vld [vmem:[%s6 + $0x8] sm:$0xff]
    %v1065 = vld [vmem:[%s6 + $0x10] sm:$0xff]
    %v1066 = vld [vmem:[%s6 + $0x18] sm:$0xff]
    %v1067 = vld [vmem:[#allocation11] sm:$0x1]
    %v1069 = vlaneseq
    %v1070 = vshrl.u32 %v1069, 7
    %v1071 = vsub.s32 0, %v1070
    %v1072 = vrot.slane %v1067, %v1071
    %v1075 = vsel %vm164, %v1061, 0
    %v1078 = vsel %vm164, %v1062, 0
    %1080 = vmatprep.subr.mxu0 0.0
    %1081 = vmatpush1.msra.mxu0 %v1063
    %1082 = vmatprep.subr.mxu0 0.0
    %1083 = vmatpush1.msra.mxu0 %v1064
    %1084 = vmatprep.subr.mxu0 0.0
    %1085 = vmatpush1.msra.mxu0 %v1065
    %1086 = vmatprep.subr.mxu0 0.0
    %1087 = vmatpush1.msra.mxu0 %v1066
    %1088 = vmatprep.subr.mxu0 0.0
    %1089 = vmatpush1.msra.mxu0 0.0
    %1090 = vmatprep.subr.mxu0 0.0
    %1091 = vmatpush1.msra.mxu0 0.0
    %1092 = vmatprep.subr.mxu0 0.0
    %1093 = vmatpush1.msra.mxu0 0.0
    %1094 = vmatprep.subr.mxu0 0.0
    %1095 = vmatpush1.msra.mxu0 0.0
    %1096 = vmatprep.subr.mxu0 0.0
    %1097 = vmatpush1.msra.mxu0 0.0
    %1098 = vmatprep.subr.mxu0 0.0
    %1099 = vmatpush1.msra.mxu0 0.0
    %1100 = vmatprep.subr.mxu0 0.0
    %1101 = vmatpush1.msra.mxu0 0.0
    %1102 = vmatprep.subr.mxu0 0.0
    %1103 = vmatpush1.msra.mxu0 0.0
    %1104 = vmatprep.subr.mxu0 0.0
    %1105 = vmatpush1.msra.mxu0 0.0
    %1106 = vmatprep.subr.mxu0 0.0
    %1107 = vmatpush1.msra.mxu0 0.0
    %1108 = vmatprep.subr.mxu0 0.0
    %1109 = vmatpush1.msra.mxu0 0.0
    %1110 = vmatprep.subr.mxu0 0.0
    %1111 = vmatpush1.msra.mxu0 0.0
    %1112 = vmatprep.subr.mxu0 0.0
    %1113 = vmatpush1.msra.mxu0 0.0
    %1114 = vmatprep.subr.mxu0 0.0
    %1115 = vmatpush1.msra.mxu0 0.0
    %1116 = vmatprep.subr.mxu0 0.0
    %1117 = vmatpush1.msra.mxu0 0.0
    %1118 = vmatprep.subr.mxu0 0.0
    %1119 = vmatpush1.msra.mxu0 0.0
    %1120 = vmatprep.subr.mxu0 0.0
    %1121 = vmatpush1.msra.mxu0 0.0
    %1122 = vmatprep.subr.mxu0 0.0
    %1123 = vmatpush1.msra.mxu0 0.0
    %1124 = vmatprep.subr.mxu0 0.0
    %1125 = vmatpush1.msra.mxu0 0.0
    %1126 = vmatprep.subr.mxu0 0.0
    %1127 = vmatpush1.msra.mxu0 0.0
    %1128 = vmatprep.subr.mxu0 0.0
    %1129 = vmatpush1.msra.mxu0 0.0
    %1130 = vmatprep.subr.mxu0 0.0
    %1131 = vmatpush1.msra.mxu0 0.0
    %1132 = vmatprep.subr.mxu0 0.0
    %1133 = vmatpush1.msra.mxu0 0.0
    %1134 = vmatprep.subr.mxu0 0.0
    %1135 = vmatpush1.msra.mxu0 0.0
    %1136 = vmatprep.subr.mxu0 0.0
    %1137 = vmatpush1.msra.mxu0 0.0
    %1138 = vmatprep.subr.mxu0 0.0
    %1139 = vmatpush1.msra.mxu0 0.0
    %1140 = vmatprep.subr.mxu0 0.0
    %1141 = vmatpush1.msra.mxu0 0.0
    %1142 = vmatprep.subr.mxu0 0.0
    %1143 = vmatpush1.msra.mxu0 0.0
    %1144 = vmatprep.mubr.f32.mxu0 0.0
    %1145 = vmatmul.mubr.f32.gmra.mrb[0].mxu0 %v1075
    %v1146 = vpop.f32.mrb[0].mxu0
    %v1147 = vadd.f32 %v1072, %v1146
    %v1148 = vpop.f32.mrb[0].mxu0
    %1149 = vmatprep.mubr.f32.mxu0 0.0
    %1150 = vmatmul.mubr.f32.gmra.mrb[0].mxu0 %v1078
    %v1151 = vpop.f32.mrb[0].mxu0
    %v1152 = vadd.f32 %v1072, %v1151
    %v1153 = vpop.f32.mrb[0].mxu0
    %1154 = vdwg.mxu0
    %v1155 = vld [vmem:[#allocation9] sm:$0xff]
    %v1156 = vld [vmem:[#allocation9 + $0x8] sm:$0xff]
    %v1157 = vld [vmem:[#allocation12] sm:$0x1]
    %v1159 = vlaneseq
    %v1160 = vshrl.u32 %v1159, 7
    %v1161 = vsub.s32 0, %v1160
    %v1162 = vrot.slane %v1157, %v1161
    %v1163 = vld [vmem:[%s10] sm:$0x3]
    %vm1164 = vcmask 130048
    %v1166 = vsel %vm1164, %v1163, 0
    %1168 = vmatprep.subr.mxu0 0.0
    %1169 = vmatpush1.msra.mxu0 %v1155
    %1170 = vmatprep.subr.mxu0 0.0
    %1171 = vmatpush1.msra.mxu0 %v1156
    %1172 = vmatprep.subr.mxu0 0.0
    %1173 = vmatpush1.msra.mxu0 0.0
    %1174 = vmatprep.subr.mxu0 0.0
    %1175 = vmatpush1.msra.mxu0 0.0
    %1176 = vmatprep.subr.mxu0 0.0
    %1177 = vmatpush1.msra.mxu0 0.0
    %1178 = vmatprep.subr.mxu0 0.0
    %1179 = vmatpush1.msra.mxu0 0.0
    %1180 = vmatprep.subr.mxu0 0.0
    %1181 = vmatpush1.msra.mxu0 0.0
    %1182 = vmatprep.subr.mxu0 0.0
    %1183 = vmatpush1.msra.mxu0 0.0
    %1184 = vmatprep.subr.mxu0 0.0
    %1185 = vmatpush1.msra.mxu0 0.0
    %1186 = vmatprep.subr.mxu0 0.0
    %1187 = vmatpush1.msra.mxu0 0.0
    %1188 = vmatprep.subr.mxu0 0.0
    %1189 = vmatpush1.msra.mxu0 0.0
    %1190 = vmatprep.subr.mxu0 0.0
    %1191 = vmatpush1.msra.mxu0 0.0
    %1192 = vmatprep.subr.mxu0 0.0
    %1193 = vmatpush1.msra.mxu0 0.0
    %1194 = vmatprep.subr.mxu0 0.0
    %1195 = vmatpush1.msra.mxu0 0.0
    %1196 = vmatprep.subr.mxu0 0.0
    %1197 = vmatpush1.msra.mxu0 0.0
    %1198 = vmatprep.subr.mxu0 0.0
    %1199 = vmatpush1.msra.mxu0 0.0
    %1200 = vmatprep.subr.mxu0 0.0
    %1201 = vmatpush1.msra.mxu0 0.0
    %1202 = vmatprep.subr.mxu0 0.0
    %1203 = vmatpush1.msra.mxu0 0.0
    %1204 = vmatprep.subr.mxu0 0.0
    %1205 = vmatpush1.msra.mxu0 0.0
    %1206 = vmatprep.subr.mxu0 0.0
    %1207 = vmatpush1.msra.mxu0 0.0
    %1208 = vmatprep.subr.mxu0 0.0
    %1209 = vmatpush1.msra.mxu0 0.0
    %1210 = vmatprep.subr.mxu0 0.0
    %1211 = vmatpush1.msra.mxu0 0.0
    %1212 = vmatprep.subr.mxu0 0.0
    %1213 = vmatpush1.msra.mxu0 0.0
    %1214 = vmatprep.subr.mxu0 0.0
    %1215 = vmatpush1.msra.mxu0 0.0
    %1216 = vmatprep.subr.mxu0 0.0
    %1217 = vmatpush1.msra.mxu0 0.0
    %1218 = vmatprep.subr.mxu0 0.0
    %1219 = vmatpush1.msra.mxu0 0.0
    %1220 = vmatprep.subr.mxu0 0.0
    %1221 = vmatpush1.msra.mxu0 0.0
    %1222 = vmatprep.subr.mxu0 0.0
    %1223 = vmatpush1.msra.mxu0 0.0
    %1224 = vmatprep.subr.mxu0 0.0
    %1225 = vmatpush1.msra.mxu0 0.0
    %1226 = vmatprep.subr.mxu0 0.0
    %1227 = vmatpush1.msra.mxu0 0.0
    %1228 = vmatprep.subr.mxu0 0.0
    %1229 = vmatpush1.msra.mxu0 0.0
    %1230 = vmatprep.subr.mxu0 0.0
    %1231 = vmatpush1.msra.mxu0 0.0
    %1232 = vmatprep.mubr.f32.mxu0 0.0
    %1233 = vmatmul.mubr.f32.gmra.mrb[0].mxu0 %v1166
    %v1234 = vpop.f32.mrb[0].mxu0
    %v1235 = vadd.f32 0.0, %v1234
    %v1236 = vpop.f32.mrb[0].mxu0
    %1237 = vdwg.mxu0
    %v1238 = vadd.f32 %v1147, %v1235
    %v1239 = vxor.u32 %v1238, 2147483648
    %v1240 = vmul.f32 %v1239, 1.442695
    %v1241 = vpow.pop %v1240
    %v1242 = vadd.f32 %v1241, 1.0
    %v1243 = vrcp.pop %v1242
    %v1244 = vmul.f32 1.0, %v1243
    %1245 = vrot.lane.b32.xlu0 %v1162, 32
    %v1246 = vpop.permute.xlu0 %1245
    %v1248 = vadd.f32 %v1235, %v1246
    %1250 = vrot.lane.b32.xlu0 %v1248, 96
    %v1251 = vpop.permute.xlu0 %1250
    %v1253 = vmul.f32 %v1244, %v1251
    %1255 = vrot.lane.b32.xlu0 %v1253, 32
    %v1256 = vpop.permute.xlu0 %1255
    %v1258 = vadd.f32 %v1147, %v1256
    %v1259 = vtanh.pop %v1258
    %v1260 = vsub.f32 1.0, %v1244
    %1262 = vrot.lane.b32.xlu0 %v1259, 112
    %v1263 = vpop.permute.xlu0 %1262
    %v1265 = vmul.f32 %v1260, %v1263
    %1266 = vrot.lane.b32.xlu0 %v1163, 16
    %v1267 = vpop.permute.xlu0 %1266
    %v1269 = vmul.f32 %v1244, %v1267
    %v1270 = vadd.f32 %v1265, %v1269
    %1272 = vrot.lane.b32.xlu0 %v1270, 112
    %v1273 = vpop.permute.xlu0 %1272
    %v1274 = vsel %vm1164, %v1273, 0
    %1276 = vmatprep.subr.mxu0 0.0
    %1277 = vmatpush1.msra.mxu0 %v1155
    %1278 = vmatprep.subr.mxu0 0.0
    %1279 = vmatpush1.msra.mxu0 %v1156
    %1280 = vmatprep.subr.mxu0 0.0
    %1281 = vmatpush1.msra.mxu0 0.0
    %1282 = vmatprep.subr.mxu0 0.0
    %1283 = vmatpush1.msra.mxu0 0.0
    %1284 = vmatprep.subr.mxu0 0.0
    %1285 = vmatpush1.msra.mxu0 0.0
    %1286 = vmatprep.subr.mxu0 0.0
    %1287 = vmatpush1.msra.mxu0 0.0
    %1288 = vmatprep.subr.mxu0 0.0
    %1289 = vmatpush1.msra.mxu0 0.0
    %1290 = vmatprep.subr.mxu0 0.0
    %1291 = vmatpush1.msra.mxu0 0.0
    %1292 = vmatprep.subr.mxu0 0.0
    %1293 = vmatpush1.msra.mxu0 0.0
    %1294 = vmatprep.subr.mxu0 0.0
    %1295 = vmatpush1.msra.mxu0 0.0
    %1296 = vmatprep.subr.mxu0 0.0
    %1297 = vmatpush1.msra.mxu0 0.0
    %1298 = vmatprep.subr.mxu0 0.0
    %1299 = vmatpush1.msra.mxu0 0.0
    %1300 = vmatprep.subr.mxu0 0.0
    %1301 = vmatpush1.msra.mxu0 0.0
    %1302 = vmatprep.subr.mxu0 0.0
    %1303 = vmatpush1.msra.mxu0 0.0
    %1304 = vmatprep.subr.mxu0 0.0
    %1305 = vmatpush1.msra.mxu0 0.0
    %1306 = vmatprep.subr.mxu0 0.0
    %1307 = vmatpush1.msra.mxu0 0.0
    %1308 = vmatprep.subr.mxu0 0.0
    %1309 = vmatpush1.msra.mxu0 0.0
    %1310 = vmatprep.subr.mxu0 0.0
    %1311 = vmatpush1.msra.mxu0 0.0
    %1312 = vmatprep.subr.mxu0 0.0
    %1313 = vmatpush1.msra.mxu0 0.0
    %1314 = vmatprep.subr.mxu0 0.0
    %1315 = vmatpush1.msra.mxu0 0.0
    %1316 = vmatprep.subr.mxu0 0.0
    %1317 = vmatpush1.msra.mxu0 0.0
    %1318 = vmatprep.subr.mxu0 0.0
    %1319 = vmatpush1.msra.mxu0 0.0
    %1320 = vmatprep.subr.mxu0 0.0
    %1321 = vmatpush1.msra.mxu0 0.0
    %1322 = vmatprep.subr.mxu0 0.0
    %1323 = vmatpush1.msra.mxu0 0.0
    %1324 = vmatprep.subr.mxu0 0.0
    %1325 = vmatpush1.msra.mxu0 0.0
    %1326 = vmatprep.subr.mxu0 0.0
    %1327 = vmatpush1.msra.mxu0 0.0
    %1328 = vmatprep.subr.mxu0 0.0
    %1329 = vmatpush1.msra.mxu0 0.0
    %1330 = vmatprep.subr.mxu0 0.0
    %1331 = vmatpush1.msra.mxu0 0.0
    %1332 = vmatprep.subr.mxu0 0.0
    %1333 = vmatpush1.msra.mxu0 0.0
    %1334 = vmatprep.subr.mxu0 0.0
    %1335 = vmatpush1.msra.mxu0 0.0
    %1336 = vmatprep.subr.mxu0 0.0
    %1337 = vmatpush1.msra.mxu0 0.0
    %1338 = vmatprep.subr.mxu0 0.0
    %1339 = vmatpush1.msra.mxu0 0.0
    %1340 = vmatprep.mubr.f32.mxu0 0.0
    %1341 = vmatmul.mubr.f32.gmra.mrb[0].mxu0 %v1274
    %v1342 = vpop.f32.mrb[0].mxu0
    %v1343 = vadd.f32 0.0, %v1342
    %v1344 = vpop.f32.mrb[0].mxu0
    %1345 = vdwg.mxu0
    %v1347 = vrot.slane %v1343, 6
    %v1349 = vadd.f32 %v1147, %v1347
    %v1350 = vxor.u32 %v1349, 2147483648
    %v1351 = vmul.f32 %v1350, 1.442695
    %v1352 = vpow.pop %v1351
    %v1353 = vadd.f32 %v1352, 1.0
    %v1354 = vrcp.pop %v1353
    %v1355 = vmul.f32 1.0, %v1354
    %v1356 = vadd.f32 %v1343, %v1246
    %v1358 = vrot.slane %v1356, 6
    %1359 = vrot.lane.b32.xlu0 %v1358, 96
    %v1360 = vpop.permute.xlu0 %1359
    %v1362 = vmul.f32 %v1355, %v1360
    %1364 = vrot.lane.b32.xlu0 %v1362, 32
    %v1365 = vpop.permute.xlu0 %1364
    %v1367 = vadd.f32 %v1147, %v1365
    %v1368 = vtanh.pop %v1367
    %v1369 = vsub.f32 1.0, %v1355
    %1371 = vrot.lane.b32.xlu0 %v1368, 112
    %v1372 = vpop.permute.xlu0 %1371
    %v1374 = vmul.f32 %v1369, %v1372
    %v1375 = vrot.slane %v1270, 6
    %v1377 = vmul.f32 %v1355, %v1375
    %v1378 = vadd.f32 %v1374, %v1377
    %v1380 = vrot.slane %v1378, 2
    %1381 = vrot.lane.b32.xlu0 %v1380, 112
    %v1382 = vpop.permute.xlu0 %1381
    %v1383 = vsel %vm1164, %v1382, 0
    %1385 = vmatprep.subr.mxu0 0.0
    %1386 = vmatpush1.msra.mxu0 %v1155
    %1387 = vmatprep.subr.mxu0 0.0
    %1388 = vmatpush1.msra.mxu0 %v1156
    %1389 = vmatprep.subr.mxu0 0.0
    %1390 = vmatpush1.msra.mxu0 0.0
    %1391 = vmatprep.subr.mxu0 0.0
    %1392 = vmatpush1.msra.mxu0 0.0
    %1393 = vmatprep.subr.mxu0 0.0
    %1394 = vmatpush1.msra.mxu0 0.0
    %1395 = vmatprep.subr.mxu0 0.0
    %1396 = vmatpush1.msra.mxu0 0.0
    %1397 = vmatprep.subr.mxu0 0.0
    %1398 = vmatpush1.msra.mxu0 0.0
    %1399 = vmatprep.subr.mxu0 0.0
    %1400 = vmatpush1.msra.mxu0 0.0
    %1401 = vmatprep.subr.mxu0 0.0
    %1402 = vmatpush1.msra.mxu0 0.0
    %1403 = vmatprep.subr.mxu0 0.0
    %1404 = vmatpush1.msra.mxu0 0.0
    %1405 = vmatprep.subr.mxu0 0.0
    %1406 = vmatpush1.msra.mxu0 0.0
    %1407 = vmatprep.subr.mxu0 0.0
    %1408 = vmatpush1.msra.mxu0 0.0
    %1409 = vmatprep.subr.mxu0 0.0
    %1410 = vmatpush1.msra.mxu0 0.0
    %1411 = vmatprep.subr.mxu0 0.0
    %1412 = vmatpush1.msra.mxu0 0.0
    %1413 = vmatprep.subr.mxu0 0.0
    %1414 = vmatpush1.msra.mxu0 0.0
    %1415 = vmatprep.subr.mxu0 0.0
    %1416 = vmatpush1.msra.mxu0 0.0
    %1417 = vmatprep.subr.mxu0 0.0
    %1418 = vmatpush1.msra.mxu0 0.0
    %1419 = vmatprep.subr.mxu0 0.0
    %1420 = vmatpush1.msra.mxu0 0.0
    %1421 = vmatprep.subr.mxu0 0.0
    %1422 = vmatpush1.msra.mxu0 0.0
    %1423 = vmatprep.subr.mxu0 0.0
    %1424 = vmatpush1.msra.mxu0 0.0
    %1425 = vmatprep.subr.mxu0 0.0
    %1426 = vmatpush1.msra.mxu0 0.0
    %1427 = vmatprep.subr.mxu0 0.0
    %1428 = vmatpush1.msra.mxu0 0.0
    %1429 = vmatprep.subr.mxu0 0.0
    %1430 = vmatpush1.msra.mxu0 0.0
    %1431 = vmatprep.subr.mxu0 0.0
    %1432 = vmatpush1.msra.mxu0 0.0
    %1433 = vmatprep.subr.mxu0 0.0
    %1434 = vmatpush1.msra.mxu0 0.0
    %1435 = vmatprep.subr.mxu0 0.0
    %1436 = vmatpush1.msra.mxu0 0.0
    %1437 = vmatprep.subr.mxu0 0.0
    %1438 = vmatpush1.msra.mxu0 0.0
    %1439 = vmatprep.subr.mxu0 0.0
    %1440 = vmatpush1.msra.mxu0 0.0
    %1441 = vmatprep.subr.mxu0 0.0
    %1442 = vmatpush1.msra.mxu0 0.0
    %1443 = vmatprep.subr.mxu0 0.0
    %1444 = vmatpush1.msra.mxu0 0.0
    %1445 = vmatprep.subr.mxu0 0.0
    %1446 = vmatpush1.msra.mxu0 0.0
    %1447 = vmatprep.subr.mxu0 0.0
    %1448 = vmatpush1.msra.mxu0 0.0
    %1449 = vmatprep.mubr.f32.mxu0 0.0
    %1450 = vmatmul.mubr.f32.gmra.mrb[0].mxu0 %v1383
    %v1451 = vpop.f32.mrb[0].mxu0
    %v1452 = vadd.f32 0.0, %v1451
    %v1453 = vpop.f32.mrb[0].mxu0
    %1454 = vdwg.mxu0
    %v1456 = vrot.slane %v1452, 4
    %v1458 = vadd.f32 %v1147, %v1456
    %v1459 = vxor.u32 %v1458, 2147483648
    %v1460 = vmul.f32 %v1459, 1.442695
    %v1461 = vpow.pop %v1460
    %v1462 = vadd.f32 %v1461, 1.0
    %v1463 = vrcp.pop %v1462
    %v1464 = vmul.f32 1.0, %v1463
    %v1465 = vadd.f32 %v1452, %v1246
    %v1467 = vrot.slane %v1465, 4
    %1468 = vrot.lane.b32.xlu0 %v1467, 96
    %v1469 = vpop.permute.xlu0 %1468
    %v1471 = vmul.f32 %v1464, %v1469
    %1473 = vrot.lane.b32.xlu0 %v1471, 32
    %v1474 = vpop.permute.xlu0 %1473
    %v1476 = vadd.f32 %v1147, %v1474
    %v1477 = vtanh.pop %v1476
    %v1478 = vsub.f32 1.0, %v1464
    %1480 = vrot.lane.b32.xlu0 %v1477, 112
    %v1481 = vpop.permute.xlu0 %1480
    %v1483 = vmul.f32 %v1478, %v1481
    %v1484 = vrot.slane %v1378, 6
    %v1486 = vmul.f32 %v1464, %v1484
    %v1487 = vadd.f32 %v1483, %v1486
    %v1489 = vrot.slane %v1487, 4
    %1490 = vrot.lane.b32.xlu0 %v1489, 112
    %v1491 = vpop.permute.xlu0 %1490
    %v1492 = vsel %vm1164, %v1491, 0
    %1494 = vmatprep.subr.mxu0 0.0
    %1495 = vmatpush1.msra.mxu0 %v1155
    %1496 = vmatprep.subr.mxu0 0.0
    %1497 = vmatpush1.msra.mxu0 %v1156
    %1498 = vmatprep.subr.mxu0 0.0
    %1499 = vmatpush1.msra.mxu0 0.0
    %1500 = vmatprep.subr.mxu0 0.0
    %1501 = vmatpush1.msra.mxu0 0.0
    %1502 = vmatprep.subr.mxu0 0.0
    %1503 = vmatpush1.msra.mxu0 0.0
    %1504 = vmatprep.subr.mxu0 0.0
    %1505 = vmatpush1.msra.mxu0 0.0
    %1506 = vmatprep.subr.mxu0 0.0
    %1507 = vmatpush1.msra.mxu0 0.0
    %1508 = vmatprep.subr.mxu0 0.0
    %1509 = vmatpush1.msra.mxu0 0.0
    %1510 = vmatprep.subr.mxu0 0.0
    %1511 = vmatpush1.msra.mxu0 0.0
    %1512 = vmatprep.subr.mxu0 0.0
    %1513 = vmatpush1.msra.mxu0 0.0
    %1514 = vmatprep.subr.mxu0 0.0
    %1515 = vmatpush1.msra.mxu0 0.0
    %1516 = vmatprep.subr.mxu0 0.0
    %1517 = vmatpush1.msra.mxu0 0.0
    %1518 = vmatprep.subr.mxu0 0.0
    %1519 = vmatpush1.msra.mxu0 0.0
    %1520 = vmatprep.subr.mxu0 0.0
    %1521 = vmatpush1.msra.mxu0 0.0
    %1522 = vmatprep.subr.mxu0 0.0
    %1523 = vmatpush1.msra.mxu0 0.0
    %1524 = vmatprep.subr.mxu0 0.0
    %1525 = vmatpush1.msra.mxu0 0.0
    %1526 = vmatprep.subr.mxu0 0.0
    %1527 = vmatpush1.msra.mxu0 0.0
    %1528 = vmatprep.subr.mxu0 0.0
    %1529 = vmatpush1.msra.mxu0 0.0
    %1530 = vmatprep.subr.mxu0 0.0
    %1531 = vmatpush1.msra.mxu0 0.0
    %1532 = vmatprep.subr.mxu0 0.0
    %1533 = vmatpush1.msra.mxu0 0.0
    %1534 = vmatprep.subr.mxu0 0.0
    %1535 = vmatpush1.msra.mxu0 0.0
    %1536 = vmatprep.subr.mxu0 0.0
    %1537 = vmatpush1.msra.mxu0 0.0
    %1538 = vmatprep.subr.mxu0 0.0
    %1539 = vmatpush1.msra.mxu0 0.0
    %1540 = vmatprep.subr.mxu0 0.0
    %1541 = vmatpush1.msra.mxu0 0.0
    %1542 = vmatprep.subr.mxu0 0.0
    %1543 = vmatpush1.msra.mxu0 0.0
    %1544 = vmatprep.subr.mxu0 0.0
    %1545 = vmatpush1.msra.mxu0 0.0
    %1546 = vmatprep.subr.mxu0 0.0
    %1547 = vmatpush1.msra.mxu0 0.0
    %1548 = vmatprep.subr.mxu0 0.0
    %1549 = vmatpush1.msra.mxu0 0.0
    %1550 = vmatprep.subr.mxu0 0.0
    %1551 = vmatpush1.msra.mxu0 0.0
    %1552 = vmatprep.subr.mxu0 0.0
    %1553 = vmatpush1.msra.mxu0 0.0
    %1554 = vmatprep.subr.mxu0 0.0
    %1555 = vmatpush1.msra.mxu0 0.0
    %1556 = vmatprep.subr.mxu0 0.0
    %1557 = vmatpush1.msra.mxu0 0.0
    %1558 = vmatprep.mubr.f32.mxu0 0.0
    %1559 = vmatmul.mubr.f32.gmra.mrb[0].mxu0 %v1492
    %v1560 = vpop.f32.mrb[0].mxu0
    %v1561 = vadd.f32 0.0, %v1560
    %v1562 = vpop.f32.mrb[0].mxu0
    %1563 = vdwg.mxu0
    %v1565 = vrot.slane %v1561, 2
    %v1567 = vadd.f32 %v1147, %v1565
    %v1568 = vxor.u32 %v1567, 2147483648
    %v1569 = vmul.f32 %v1568, 1.442695
    %v1570 = vpow.pop %v1569
    %v1571 = vadd.f32 %v1570, 1.0
    %v1572 = vrcp.pop %v1571
    %v1573 = vmul.f32 1.0, %v1572
    %v1574 = vadd.f32 %v1561, %v1246
    %v1576 = vrot.slane %v1574, 2
    %1577 = vrot.lane.b32.xlu0 %v1576, 96
    %v1578 = vpop.permute.xlu0 %1577
    %v1580 = vmul.f32 %v1573, %v1578
    %1582 = vrot.lane.b32.xlu0 %v1580, 32
    %v1583 = vpop.permute.xlu0 %1582
    %v1585 = vadd.f32 %v1147, %v1583
    %v1586 = vtanh.pop %v1585
    %v1587 = vsub.f32 1.0, %v1573
    %1589 = vrot.lane.b32.xlu0 %v1586, 112
    %v1590 = vpop.permute.xlu0 %1589
    %v1592 = vmul.f32 %v1587, %v1590
    %v1593 = vrot.slane %v1487, 6
    %v1595 = vmul.f32 %v1573, %v1593
    %v1596 = vadd.f32 %v1592, %v1595
    %v1598 = vrot.slane %v1596, 6
    %1599 = vrot.lane.b32.xlu0 %v1598, 112
    %v1600 = vpop.permute.xlu0 %1599
    %v1601 = vsel %vm1164, %v1600, 0
    %1603 = vmatprep.subr.mxu0 0.0
    %1604 = vmatpush1.msra.mxu0 %v1155
    %1605 = vmatprep.subr.mxu0 0.0
    %1606 = vmatpush1.msra.mxu0 %v1156
    %1607 = vmatprep.subr.mxu0 0.0
    %1608 = vmatpush1.msra.mxu0 0.0
    %1609 = vmatprep.subr.mxu0 0.0
    %1610 = vmatpush1.msra.mxu0 0.0
    %1611 = vmatprep.subr.mxu0 0.0
    %1612 = vmatpush1.msra.mxu0 0.0
    %1613 = vmatprep.subr.mxu0 0.0
    %1614 = vmatpush1.msra.mxu0 0.0
    %1615 = vmatprep.subr.mxu0 0.0
    %1616 = vmatpush1.msra.mxu0 0.0
    %1617 = vmatprep.subr.mxu0 0.0
    %1618 = vmatpush1.msra.mxu0 0.0
    %1619 = vmatprep.subr.mxu0 0.0
    %1620 = vmatpush1.msra.mxu0 0.0
    %1621 = vmatprep.subr.mxu0 0.0
    %1622 = vmatpush1.msra.mxu0 0.0
    %1623 = vmatprep.subr.mxu0 0.0
    %1624 = vmatpush1.msra.mxu0 0.0
    %1625 = vmatprep.subr.mxu0 0.0
    %1626 = vmatpush1.msra.mxu0 0.0
    %1627 = vmatprep.subr.mxu0 0.0
    %1628 = vmatpush1.msra.mxu0 0.0
    %1629 = vmatprep.subr.mxu0 0.0
    %1630 = vmatpush1.msra.mxu0 0.0
    %1631 = vmatprep.subr.mxu0 0.0
    %1632 = vmatpush1.msra.mxu0 0.0
    %1633 = vmatprep.subr.mxu0 0.0
    %1634 = vmatpush1.msra.mxu0 0.0
    %1635 = vmatprep.subr.mxu0 0.0
    %1636 = vmatpush1.msra.mxu0 0.0
    %1637 = vmatprep.subr.mxu0 0.0
    %1638 = vmatpush1.msra.mxu0 0.0
    %1639 = vmatprep.subr.mxu0 0.0
    %1640 = vmatpush1.msra.mxu0 0.0
    %1641 = vmatprep.subr.mxu0 0.0
    %1642 = vmatpush1.msra.mxu0 0.0
    %1643 = vmatprep.subr.mxu0 0.0
    %1644 = vmatpush1.msra.mxu0 0.0
    %1645 = vmatprep.subr.mxu0 0.0
    %1646 = vmatpush1.msra.mxu0 0.0
    %1647 = vmatprep.subr.mxu0 0.0
    %1648 = vmatpush1.msra.mxu0 0.0
    %1649 = vmatprep.subr.mxu0 0.0
    %1650 = vmatpush1.msra.mxu0 0.0
    %1651 = vmatprep.subr.mxu0 0.0
    %1652 = vmatpush1.msra.mxu0 0.0
    %1653 = vmatprep.subr.mxu0 0.0
    %1654 = vmatpush1.msra.mxu0 0.0
    %1655 = vmatprep.subr.mxu0 0.0
    %1656 = vmatpush1.msra.mxu0 0.0
    %1657 = vmatprep.subr.mxu0 0.0
    %1658 = vmatpush1.msra.mxu0 0.0
    %1659 = vmatprep.subr.mxu0 0.0
    %1660 = vmatpush1.msra.mxu0 0.0
    %1661 = vmatprep.subr.mxu0 0.0
    %1662 = vmatpush1.msra.mxu0 0.0
    %1663 = vmatprep.subr.mxu0 0.0
    %1664 = vmatpush1.msra.mxu0 0.0
    %1665 = vmatprep.subr.mxu0 0.0
    %1666 = vmatpush1.msra.mxu0 0.0
    %1667 = vmatprep.mubr.f32.mxu0 0.0
    %1668 = vmatmul.mubr.f32.gmra.mrb[0].mxu0 %v1601
    %v1669 = vpop.f32.mrb[0].mxu0
    %v1670 = vadd.f32 0.0, %v1669
    %v1671 = vpop.f32.mrb[0].mxu0
    %1672 = vdwg.mxu0
    %v1673 = vadd.f32 %v1152, %v1670
    %v1674 = vxor.u32 %v1673, 2147483648
    %v1675 = vmul.f32 %v1674, 1.442695
    %v1676 = vpow.pop %v1675
    %v1677 = vadd.f32 %v1676, 1.0
    %v1678 = vrcp.pop %v1677
    %v1679 = vmul.f32 1.0, %v1678
    %v1680 = vadd.f32 %v1670, %v1246
    %1682 = vrot.lane.b32.xlu0 %v1680, 96
    %v1683 = vpop.permute.xlu0 %1682
    %v1685 = vmul.f32 %v1679, %v1683
    %1687 = vrot.lane.b32.xlu0 %v1685, 32
    %v1688 = vpop.permute.xlu0 %1687
    %v1690 = vadd.f32 %v1152, %v1688
    %v1691 = vtanh.pop %v1690
    %v1692 = vsub.f32 1.0, %v1679
    %1694 = vrot.lane.b32.xlu0 %v1691, 112
    %v1695 = vpop.permute.xlu0 %1694
    %v1697 = vmul.f32 %v1692, %v1695
    %v1699 = vmul.f32 %v1679, %v1598
    %v1700 = vadd.f32 %v1697, %v1699
    %1702 = vrot.lane.b32.xlu0 %v1700, 112
    %v1703 = vpop.permute.xlu0 %1702
    %v1704 = vsel %vm1164, %v1703, 0
    %1706 = vmatprep.subr.mxu0 0.0
    %1707 = vmatpush1.msra.mxu0 %v1155
    %1708 = vmatprep.subr.mxu0 0.0
    %1709 = vmatpush1.msra.mxu0 %v1156
    %1710 = vmatprep.subr.mxu0 0.0
    %1711 = vmatpush1.msra.mxu0 0.0
    %1712 = vmatprep.subr.mxu0 0.0
    %1713 = vmatpush1.msra.mxu0 0.0
    %1714 = vmatprep.subr.mxu0 0.0
    %1715 = vmatpush1.msra.mxu0 0.0
    %1716 = vmatprep.subr.mxu0 0.0
    %1717 = vmatpush1.msra.mxu0 0.0
    %1718 = vmatprep.subr.mxu0 0.0
    %1719 = vmatpush1.msra.mxu0 0.0
    %1720 = vmatprep.subr.mxu0 0.0
    %1721 = vmatpush1.msra.mxu0 0.0
    %1722 = vmatprep.subr.mxu0 0.0
    %1723 = vmatpush1.msra.mxu0 0.0
    %1724 = vmatprep.subr.mxu0 0.0
    %1725 = vmatpush1.msra.mxu0 0.0
    %1726 = vmatprep.subr.mxu0 0.0
    %1727 = vmatpush1.msra.mxu0 0.0
    %1728 = vmatprep.subr.mxu0 0.0
    %1729 = vmatpush1.msra.mxu0 0.0
    %1730 = vmatprep.subr.mxu0 0.0
    %1731 = vmatpush1.msra.mxu0 0.0
    %1732 = vmatprep.subr.mxu0 0.0
    %1733 = vmatpush1.msra.mxu0 0.0
    %1734 = vmatprep.subr.mxu0 0.0
    %1735 = vmatpush1.msra.mxu0 0.0
    %1736 = vmatprep.subr.mxu0 0.0
    %1737 = vmatpush1.msra.mxu0 0.0
    %1738 = vmatprep.subr.mxu0 0.0
    %1739 = vmatpush1.msra.mxu0 0.0
    %1740 = vmatprep.subr.mxu0 0.0
    %1741 = vmatpush1.msra.mxu0 0.0
    %1742 = vmatprep.subr.mxu0 0.0
    %1743 = vmatpush1.msra.mxu0 0.0
    %1744 = vmatprep.subr.mxu0 0.0
    %1745 = vmatpush1.msra.mxu0 0.0
    %1746 = vmatprep.subr.mxu0 0.0
    %1747 = vmatpush1.msra.mxu0 0.0
    %1748 = vmatprep.subr.mxu0 0.0
    %1749 = vmatpush1.msra.mxu0 0.0
    %1750 = vmatprep.subr.mxu0 0.0
    %1751 = vmatpush1.msra.mxu0 0.0
    %1752 = vmatprep.subr.mxu0 0.0
    %1753 = vmatpush1.msra.mxu0 0.0
    %1754 = vmatprep.subr.mxu0 0.0
    %1755 = vmatpush1.msra.mxu0 0.0
    %1756 = vmatprep.subr.mxu0 0.0
    %1757 = vmatpush1.msra.mxu0 0.0
    %1758 = vmatprep.subr.mxu0 0.0
    %1759 = vmatpush1.msra.mxu0 0.0
    %1760 = vmatprep.subr.mxu0 0.0
    %1761 = vmatpush1.msra.mxu0 0.0
    %1762 = vmatprep.subr.mxu0 0.0
    %1763 = vmatpush1.msra.mxu0 0.0
    %1764 = vmatprep.subr.mxu0 0.0
    %1765 = vmatpush1.msra.mxu0 0.0
    %1766 = vmatprep.subr.mxu0 0.0
    %1767 = vmatpush1.msra.mxu0 0.0
    %1768 = vmatprep.subr.mxu0 0.0
    %1769 = vmatpush1.msra.mxu0 0.0
    %1770 = vmatprep.mubr.f32.mxu0 0.0
    %1771 = vmatmul.mubr.f32.gmra.mrb[0].mxu0 %v1704
    %v1772 = vpop.f32.mrb[0].mxu0
    %v1773 = vadd.f32 0.0, %v1772
    %v1774 = vpop.f32.mrb[0].mxu0
    %1775 = vdwg.mxu0
    %v1777 = vrot.slane %v1773, 6
    %v1779 = vadd.f32 %v1152, %v1777
    %v1780 = vxor.u32 %v1779, 2147483648
    %v1781 = vmul.f32 %v1780, 1.442695
    %v1782 = vpow.pop %v1781
    %v1783 = vadd.f32 %v1782, 1.0
    %v1784 = vrcp.pop %v1783
    %v1785 = vmul.f32 1.0, %v1784
    %v1786 = vadd.f32 %v1773, %v1246
    %v1788 = vrot.slane %v1786, 6
    %1789 = vrot.lane.b32.xlu0 %v1788, 96
    %v1790 = vpop.permute.xlu0 %1789
    %v1792 = vmul.f32 %v1785, %v1790
    %1794 = vrot.lane.b32.xlu0 %v1792, 32
    %v1795 = vpop.permute.xlu0 %1794
    %v1797 = vadd.f32 %v1152, %v1795
    %v1798 = vtanh.pop %v1797
    %v1799 = vsub.f32 1.0, %v1785
    %1801 = vrot.lane.b32.xlu0 %v1798, 112
    %v1802 = vpop.permute.xlu0 %1801
    %v1804 = vmul.f32 %v1799, %v1802
    %v1805 = vrot.slane %v1700, 6
    %v1807 = vmul.f32 %v1785, %v1805
    %v1808 = vadd.f32 %v1804, %v1807
    %v1810 = vrot.slane %v1808, 2
    %1811 = vrot.lane.b32.xlu0 %v1810, 112
    %v1812 = vpop.permute.xlu0 %1811
    %v1813 = vsel %vm1164, %v1812, 0
    %1815 = vmatprep.subr.mxu0 0.0
    %1816 = vmatpush1.msra.mxu0 %v1155
    %1817 = vmatprep.subr.mxu0 0.0
    %1818 = vmatpush1.msra.mxu0 %v1156
    %1819 = vmatprep.subr.mxu0 0.0
    %1820 = vmatpush1.msra.mxu0 0.0
    %1821 = vmatprep.subr.mxu0 0.0
    %1822 = vmatpush1.msra.mxu0 0.0
    %1823 = vmatprep.subr.mxu0 0.0
    %1824 = vmatpush1.msra.mxu0 0.0
    %1825 = vmatprep.subr.mxu0 0.0
    %1826 = vmatpush1.msra.mxu0 0.0
    %1827 = vmatprep.subr.mxu0 0.0
    %1828 = vmatpush1.msra.mxu0 0.0
    %1829 = vmatprep.subr.mxu0 0.0
    %1830 = vmatpush1.msra.mxu0 0.0
    %1831 = vmatprep.subr.mxu0 0.0
    %1832 = vmatpush1.msra.mxu0 0.0
    %1833 = vmatprep.subr.mxu0 0.0
    %1834 = vmatpush1.msra.mxu0 0.0
    %1835 = vmatprep.subr.mxu0 0.0
    %1836 = vmatpush1.msra.mxu0 0.0
    %1837 = vmatprep.subr.mxu0 0.0
    %1838 = vmatpush1.msra.mxu0 0.0
    %1839 = vmatprep.subr.mxu0 0.0
    %1840 = vmatpush1.msra.mxu0 0.0
    %1841 = vmatprep.subr.mxu0 0.0
    %1842 = vmatpush1.msra.mxu0 0.0
    %1843 = vmatprep.subr.mxu0 0.0
    %1844 = vmatpush1.msra.mxu0 0.0
    %1845 = vmatprep.subr.mxu0 0.0
    %1846 = vmatpush1.msra.mxu0 0.0
    %1847 = vmatprep.subr.mxu0 0.0
    %1848 = vmatpush1.msra.mxu0 0.0
    %1849 = vmatprep.subr.mxu0 0.0
    %1850 = vmatpush1.msra.mxu0 0.0
    %1851 = vmatprep.subr.mxu0 0.0
    %1852 = vmatpush1.msra.mxu0 0.0
    %1853 = vmatprep.subr.mxu0 0.0
    %1854 = vmatpush1.msra.mxu0 0.0
    %1855 = vmatprep.subr.mxu0 0.0
    %1856 = vmatpush1.msra.mxu0 0.0
    %1857 = vmatprep.subr.mxu0 0.0
    %1858 = vmatpush1.msra.mxu0 0.0
    %1859 = vmatprep.subr.mxu0 0.0
    %1860 = vmatpush1.msra.mxu0 0.0
    %1861 = vmatprep.subr.mxu0 0.0
    %1862 = vmatpush1.msra.mxu0 0.0
    %1863 = vmatprep.subr.mxu0 0.0
    %1864 = vmatpush1.msra.mxu0 0.0
    %1865 = vmatprep.subr.mxu0 0.0
    %1866 = vmatpush1.msra.mxu0 0.0
    %1867 = vmatprep.subr.mxu0 0.0
    %1868 = vmatpush1.msra.mxu0 0.0
    %1869 = vmatprep.subr.mxu0 0.0
    %1870 = vmatpush1.msra.mxu0 0.0
    %1871 = vmatprep.subr.mxu0 0.0
    %1872 = vmatpush1.msra.mxu0 0.0
    %1873 = vmatprep.subr.mxu0 0.0
    %1874 = vmatpush1.msra.mxu0 0.0
    %1875 = vmatprep.subr.mxu0 0.0
    %1876 = vmatpush1.msra.mxu0 0.0
    %1877 = vmatprep.subr.mxu0 0.0
    %1878 = vmatpush1.msra.mxu0 0.0
    %1879 = vmatprep.mubr.f32.mxu0 0.0
    %1880 = vmatmul.mubr.f32.gmra.mrb[0].mxu0 %v1813
    %v1881 = vpop.f32.mrb[0].mxu0
    %v1882 = vadd.f32 0.0, %v1881
    %v1883 = vpop.f32.mrb[0].mxu0
    %1884 = vdwg.mxu0
    %v1886 = vrot.slane %v1882, 4
    %v1888 = vadd.f32 %v1152, %v1886
    %v1889 = vxor.u32 %v1888, 2147483648
    %v1890 = vmul.f32 %v1889, 1.442695
    %v1891 = vpow.pop %v1890
    %v1892 = vadd.f32 %v1891, 1.0
    %v1893 = vrcp.pop %v1892
    %v1894 = vmul.f32 1.0, %v1893
    %v1895 = vadd.f32 %v1882, %v1246
    %v1897 = vrot.slane %v1895, 4
    %1898 = vrot.lane.b32.xlu0 %v1897, 96
    %v1899 = vpop.permute.xlu0 %1898
    %v1901 = vmul.f32 %v1894, %v1899
    %1903 = vrot.lane.b32.xlu0 %v1901, 32
    %v1904 = vpop.permute.xlu0 %1903
    %v1906 = vadd.f32 %v1152, %v1904
    %v1907 = vtanh.pop %v1906
    %v1908 = vsub.f32 1.0, %v1894
    %1910 = vrot.lane.b32.xlu0 %v1907, 112
    %v1911 = vpop.permute.xlu0 %1910
    %v1913 = vmul.f32 %v1908, %v1911
    %v1914 = vrot.slane %v1808, 6
    %v1916 = vmul.f32 %v1894, %v1914
    %v1917 = vadd.f32 %v1913, %v1916
    %v1919 = vrot.slane %v1917, 4
    %1920 = vrot.lane.b32.xlu0 %v1919, 112
    %v1921 = vpop.permute.xlu0 %1920
    %v1922 = vsel %vm1164, %v1921, 0
    %1924 = vmatprep.subr.mxu0 0.0
    %1925 = vmatpush1.msra.mxu0 %v1155
    %1926 = vmatprep.subr.mxu0 0.0
    %1927 = vmatpush1.msra.mxu0 %v1156
    %1928 = vmatprep.subr.mxu0 0.0
    %1929 = vmatpush1.msra.mxu0 0.0
    %1930 = vmatprep.subr.mxu0 0.0
    %1931 = vmatpush1.msra.mxu0 0.0
    %1932 = vmatprep.subr.mxu0 0.0
    %1933 = vmatpush1.msra.mxu0 0.0
    %1934 = vmatprep.subr.mxu0 0.0
    %1935 = vmatpush1.msra.mxu0 0.0
    %1936 = vmatprep.subr.mxu0 0.0
    %1937 = vmatpush1.msra.mxu0 0.0
    %1938 = vmatprep.subr.mxu0 0.0
    %1939 = vmatpush1.msra.mxu0 0.0
    %1940 = vmatprep.subr.mxu0 0.0
    %1941 = vmatpush1.msra.mxu0 0.0
    %1942 = vmatprep.subr.mxu0 0.0
    %1943 = vmatpush1.msra.mxu0 0.0
    %1944 = vmatprep.subr.mxu0 0.0
    %1945 = vmatpush1.msra.mxu0 0.0
    %1946 = vmatprep.subr.mxu0 0.0
    %1947 = vmatpush1.msra.mxu0 0.0
    %1948 = vmatprep.subr.mxu0 0.0
    %1949 = vmatpush1.msra.mxu0 0.0
    %1950 = vmatprep.subr.mxu0 0.0
    %1951 = vmatpush1.msra.mxu0 0.0
    %1952 = vmatprep.subr.mxu0 0.0
    %1953 = vmatpush1.msra.mxu0 0.0
    %1954 = vmatprep.subr.mxu0 0.0
    %1955 = vmatpush1.msra.mxu0 0.0
    %1956 = vmatprep.subr.mxu0 0.0
    %1957 = vmatpush1.msra.mxu0 0.0
    %1958 = vmatprep.subr.mxu0 0.0
    %1959 = vmatpush1.msra.mxu0 0.0
    %1960 = vmatprep.subr.mxu0 0.0
    %1961 = vmatpush1.msra.mxu0 0.0
    %1962 = vmatprep.subr.mxu0 0.0
    %1963 = vmatpush1.msra.mxu0 0.0
    %1964 = vmatprep.subr.mxu0 0.0
    %1965 = vmatpush1.msra.mxu0 0.0
    %1966 = vmatprep.subr.mxu0 0.0
    %1967 = vmatpush1.msra.mxu0 0.0
    %1968 = vmatprep.subr.mxu0 0.0
    %1969 = vmatpush1.msra.mxu0 0.0
    %1970 = vmatprep.subr.mxu0 0.0
    %1971 = vmatpush1.msra.mxu0 0.0
    %1972 = vmatprep.subr.mxu0 0.0
    %1973 = vmatpush1.msra.mxu0 0.0
    %1974 = vmatprep.subr.mxu0 0.0
    %1975 = vmatpush1.msra.mxu0 0.0
    %1976 = vmatprep.subr.mxu0 0.0
    %1977 = vmatpush1.msra.mxu0 0.0
    %1978 = vmatprep.subr.mxu0 0.0
    %1979 = vmatpush1.msra.mxu0 0.0
    %1980 = vmatprep.subr.mxu0 0.0
    %1981 = vmatpush1.msra.mxu0 0.0
    %1982 = vmatprep.subr.mxu0 0.0
    %1983 = vmatpush1.msra.mxu0 0.0
    %1984 = vmatprep.subr.mxu0 0.0
    %1985 = vmatpush1.msra.mxu0 0.0
    %1986 = vmatprep.subr.mxu0 0.0
    %1987 = vmatpush1.msra.mxu0 0.0
    %1988 = vmatprep.mubr.f32.mxu0 0.0
    %1989 = vmatmul.mubr.f32.gmra.mrb[0].mxu0 %v1922
    %v1990 = vpop.f32.mrb[0].mxu0
    %v1991 = vadd.f32 0.0, %v1990
    %v1992 = vpop.f32.mrb[0].mxu0
    %1993 = vdwg.mxu0
    %v1995 = vrot.slane %v1991, 2
    %v1997 = vadd.f32 %v1152, %v1995
    %v1998 = vxor.u32 %v1997, 2147483648
    %v1999 = vmul.f32 %v1998, 1.442695
    %v2000 = vpow.pop %v1999
    %v2001 = vadd.f32 %v2000, 1.0
    %v2002 = vrcp.pop %v2001
    %v2003 = vmul.f32 1.0, %v2002
    %v2004 = vadd.f32 %v1991, %v1246
    %v2006 = vrot.slane %v2004, 2
    %2007 = vrot.lane.b32.xlu0 %v2006, 96
    %v2008 = vpop.permute.xlu0 %2007
    %v2010 = vmul.f32 %v2003, %v2008
    %2012 = vrot.lane.b32.xlu0 %v2010, 32
    %v2013 = vpop.permute.xlu0 %2012
    %v2015 = vadd.f32 %v1152, %v2013
    %v2016 = vtanh.pop %v2015
    %v2017 = vsub.f32 1.0, %v2003
    %2019 = vrot.lane.b32.xlu0 %v2016, 112
    %v2020 = vpop.permute.xlu0 %2019
    %v2022 = vmul.f32 %v2017, %v2020
    %v2023 = vrot.slane %v1917, 6
    %v2025 = vmul.f32 %v2003, %v2023
    %v2026 = vadd.f32 %v2022, %v2025
    %2028 = vrot.lane.b32.xlu0 %v2026, 112
    %v2029 = vpop.permute.xlu0 %2028
    %vm2031 = vcmask 130054
    %2032 = vst.msk [vmem:[#allocation17 - $0x6] sm:$0xc0] %vm2031, %v2029
    %v2033 = vld [vmem:[%s11] sm:$0xff]
    %v2034 = vld [vmem:[%s11 + $0x8] sm:$0xff]
    %v2035 = vld [vmem:[%s12] sm:$0x1]
    %v2037 = vlaneseq
    %v2038 = vshrl.u32 %v2037, 7
    %v2039 = vsub.s32 0, %v2038
    %v2040 = vrot.slane %v2035, %v2039
    %v2042 = vrot.slane %v2026, 6
    %2043 = vrot.lane.b32.xlu0 %v2042, 112
    %v2044 = vpop.permute.xlu0 %2043
    %v2045 = vsel %vm1164, %v2044, 0
    %2047 = vmatprep.subr.mxu0 0.0
    %2048 = vmatpush1.msra.mxu0 %v2033
    %2049 = vmatprep.subr.mxu0 0.0
    %2050 = vmatpush1.msra.mxu0 %v2034
    %2051 = vmatprep.subr.mxu0 0.0
    %2052 = vmatpush1.msra.mxu0 0.0
    %2053 = vmatprep.subr.mxu0 0.0
    %2054 = vmatpush1.msra.mxu0 0.0
    %2055 = vmatprep.subr.mxu0 0.0
    %2056 = vmatpush1.msra.mxu0 0.0
    %2057 = vmatprep.subr.mxu0 0.0
    %2058 = vmatpush1.msra.mxu0 0.0
    %2059 = vmatprep.subr.mxu0 0.0
    %2060 = vmatpush1.msra.mxu0 0.0
    %2061 = vmatprep.subr.mxu0 0.0
    %2062 = vmatpush1.msra.mxu0 0.0
    %2063 = vmatprep.subr.mxu0 0.0
    %2064 = vmatpush1.msra.mxu0 0.0
    %2065 = vmatprep.subr.mxu0 0.0
    %2066 = vmatpush1.msra.mxu0 0.0
    %2067 = vmatprep.subr.mxu0 0.0
    %2068 = vmatpush1.msra.mxu0 0.0
    %2069 = vmatprep.subr.mxu0 0.0
    %2070 = vmatpush1.msra.mxu0 0.0
    %2071 = vmatprep.subr.mxu0 0.0
    %2072 = vmatpush1.msra.mxu0 0.0
    %2073 = vmatprep.subr.mxu0 0.0
    %2074 = vmatpush1.msra.mxu0 0.0
    %2075 = vmatprep.subr.mxu0 0.0
    %2076 = vmatpush1.msra.mxu0 0.0
    %2077 = vmatprep.subr.mxu0 0.0
    %2078 = vmatpush1.msra.mxu0 0.0
    %2079 = vmatprep.subr.mxu0 0.0
    %2080 = vmatpush1.msra.mxu0 0.0
    %2081 = vmatprep.subr.mxu0 0.0
    %2082 = vmatpush1.msra.mxu0 0.0
    %2083 = vmatprep.subr.mxu0 0.0
    %2084 = vmatpush1.msra.mxu0 0.0
    %2085 = vmatprep.subr.mxu0 0.0
    %2086 = vmatpush1.msra.mxu0 0.0
    %2087 = vmatprep.subr.mxu0 0.0
    %2088 = vmatpush1.msra.mxu0 0.0
    %2089 = vmatprep.subr.mxu0 0.0
    %2090 = vmatpush1.msra.mxu0 0.0
    %2091 = vmatprep.subr.mxu0 0.0
    %2092 = vmatpush1.msra.mxu0 0.0
    %2093 = vmatprep.subr.mxu0 0.0
    %2094 = vmatpush1.msra.mxu0 0.0
    %2095 = vmatprep.subr.mxu0 0.0
    %2096 = vmatpush1.msra.mxu0 0.0
    %2097 = vmatprep.subr.mxu0 0.0
    %2098 = vmatpush1.msra.mxu0 0.0
    %2099 = vmatprep.subr.mxu0 0.0
    %2100 = vmatpush1.msra.mxu0 0.0
    %2101 = vmatprep.subr.mxu0 0.0
    %2102 = vmatpush1.msra.mxu0 0.0
    %2103 = vmatprep.subr.mxu0 0.0
    %2104 = vmatpush1.msra.mxu0 0.0
    %2105 = vmatprep.subr.mxu0 0.0
    %2106 = vmatpush1.msra.mxu0 0.0
    %2107 = vmatprep.subr.mxu0 0.0
    %2108 = vmatpush1.msra.mxu0 0.0
    %2109 = vmatprep.subr.mxu0 0.0
    %2110 = vmatpush1.msra.mxu0 0.0
    %2111 = vmatprep.mubr.f32.mxu0 0.0
    %2112 = vmatmul.mubr.f32.gmra.mrb[0].mxu0 %v2045
    %v2113 = vpop.f32.mrb[0].mxu0
    %v2114 = vadd.f32 %v2040, %v2113
    %v2115 = vpop.f32.mrb[0].mxu0
    %2116 = vdwg.mxu0
    %v2117 = vtanh.pop %v2114
    %vm2118 = vcmask 123904
    %2119 = vst.msk [vmem:[#allocation14] sm:$0x3] %vm2118, %v2117
    // Predicated region
    $region78: #{tpu_custom_call.1} parent=1 // pred_check
      _
    $region79: #{tpu_custom_call.1} parent=1 // pred_check_branch
      %2121 = sbr.rel (0) target = $region81
    $region80: #{tpu_custom_call.1} parent=1 // pred_region
      %s2123 = ssub.s32 32, 32
      %2124 = vsyncadd [#allocation5], %s2123
      %s2126 = sshll.u32 [#allocation14], 4
      %s2127 = int_to_ptr.vmem [resolvable:$true] %s2126
      %2129 = dma.vmem_to_hbm [thread:$0]  %s2127, 32, %s13, [#allocation5]
    $region81: #{tpu_custom_call.1} parent=1 // pred_fallthru
      _
    // Predicated region
    $region82: #{tpu_custom_call.1} parent=1 // pred_check
      _
    $region83: #{tpu_custom_call.1} parent=1 // pred_check_branch
      %2131 = sbr.rel (0) target = $region85
    $region84: #{tpu_custom_call.1} parent=1 // pred_region
      %s2133 = ssub.s32 32, 32
      %2134 = vsyncadd [#allocation16], %s2133
      %s2136 = sshll.u32 [#allocation15], 4
      %s2137 = int_to_ptr.vmem [resolvable:$true] %s2136
      %2139 = dma.vmem_to_hbm [thread:$0]  %s2137, 32, %s14, [#allocation16]
    $region85: #{tpu_custom_call.1} parent=1 // pred_fallthru
      _
    // Predicated region
    $region86: #{tpu_custom_call.1} parent=1 // pred_check
      _
    $region87: #{tpu_custom_call.1} parent=1 // pred_check_branch
      %2141 = sbr.rel (0) target = $region89
    $region88: #{tpu_custom_call.1} parent=1 // pred_region
      %s2143 = ssub.s32 32, 32
      %2144 = vsyncadd [#allocation16], %s2143
      %s2146 = sshll.u32 [#allocation17], 4
      %s2147 = int_to_ptr.vmem [resolvable:$true] %s2146
      %2149 = dma.vmem_to_hbm [thread:$0]  %s2147, 32, %s15, [#allocation16]
    $region89: #{tpu_custom_call.1} parent=1 // pred_fallthru
      _
    // Predicated region
    $region90: #{tpu_custom_call.1} parent=1 // pred_check
      _
    $region91: #{tpu_custom_call.1} parent=1 // pred_check_branch
      %2151 = sbr.rel (0) target = $region93
    $region92: #{tpu_custom_call.1} parent=1 // pred_region
      %2152 = dma.done [#allocation5], 32
    $region93: #{tpu_custom_call.1} parent=1 // pred_fallthru
      _
    // Predicated region
    $region94: #{tpu_custom_call.1} parent=1 // pred_check
      _
    $region95: #{tpu_custom_call.1} parent=1 // pred_check_branch
      %2154 = sbr.rel (0) target = $region97
    $region96: #{tpu_custom_call.1} parent=1 // pred_region
      %2155 = dma.done [#allocation16], 32
    $region97: #{tpu_custom_call.1} parent=1 // pred_fallthru
      _
    // Predicated region
    $region98: #{tpu_custom_call.1} parent=1 // pred_check
      _
    $region99: #{tpu_custom_call.1} parent=1 // pred_check_branch
      %2157 = sbr.rel (0) target = $region101
    $region100: #{tpu_custom_call.1} parent=1 // pred_region
      %2158 = dma.done [#allocation16], 32
    $region101: #{tpu_custom_call.1} parent=1 // pred_fallthru
      _
    %2159 = vsyncpa [#allocation4], 1
    %2160 = vsyncpa [#allocation7], 1
    %2161 = vsyncpa [#allocation10], 1
    %2162 = vsyncpa [#allocation13], 1
    %2163 = vsyncpa [#allocation5], 1
    %2164 = vsyncpa [#allocation16], 1

</llo_original>
